<compile_context>
chip_gen: v7x
topology: tpu7x:2x2x1
jax: 0.10.0
libtpu: 0.0.40
codegen_flags: <defaults>
</compile_context>

<pallas_src>
import numpy as np
import jax
import jax.numpy as jnp
from jax.experimental import pallas as pl
from jax.experimental.pallas import tpu as pltpu

LN_EPS = 1e-5   # nn.LayerNorm default
HEAD_W = 8      # fused head-2 width: col 0 = actor, col 1 = critic, rest zero


def _round_up(x, m):
    return ((x + m - 1) // m) * m


def _layernorm(h, gamma, beta):
    mu = jnp.mean(h, axis=-1, keepdims=True)
    var = jnp.mean((h - mu) ** 2, axis=-1, keepdims=True)
    inv = jax.lax.rsqrt(var + LN_EPS)          # EUP rsqrt (free slot)
    return (h - mu) * inv * gamma + beta


def ppo_forward_kernel(x_ref, w1_ref, w2_ref, wh1_ref, wh2_ref,
                       vec_ref, bh2_ref, mean_ref, value_ref):
    # Packed per-feature vectors, loaded once per grid step.
    b1, g1, be1 = vec_ref[0:1, :], vec_ref[1:2, :], vec_ref[2:3, :]
    b2, g2, be2 = vec_ref[3:4, :], vec_ref[4:5, :], vec_ref[5:6, :]
    bh1 = vec_ref[6:7, :]                      # [ba1 | bc1]

    x = x_ref[...]

    # --- state_encoder: (Linear -> LayerNorm -> ReLU) x 2 ---
    h = jnp.dot(x, w1_ref[...], preferred_element_type=jnp.float32) + b1
    h = jnp.maximum(_layernorm(h, g1, be1), 0.0)
    h = jnp.dot(h, w2_ref[...], preferred_element_type=jnp.float32) + b2
    h = jnp.maximum(_layernorm(h, g2, be2), 0.0)

    # --- fused actor/critic first layers: one matmul -> [actor | critic] ---
    ac = jnp.dot(h, wh1_ref[...], preferred_element_type=jnp.float32) + bh1
    ac = jnp.maximum(ac, 0.0)

    # --- fused final layers: block-diagonal (2*half, 8) weight ---
    raw = jnp.dot(ac, wh2_ref[...], preferred_element_type=jnp.float32) + bh2_ref[...]

    # tanh only on the narrow actor column (no full-width transcendental,
    # no iota/compare/select); value column stays linear.
    mean_ref[...] = jnp.tanh(raw[:, 0:1])
    value_ref[...] = raw[:, 1:2]


def ppo_policy_forward(state, packed, *, block_rows=1024):
    """state: (B, state_dim) f32. Returns (action_mean (B,1), value (B,1))."""
    B, state_dim = state.shape
    H = packed["w1"].shape[1]
    H1 = packed["wh1"].shape[1]                # 2 * (hidden // 2)

    # Large tiles (grid-step overhead dominates at these tiny per-tile costs),
    # but keep >= 2 grid steps so v7x's two TensorCores both get work.
    tb = min(block_rows, B)
    if B >= 16:
        tb = min(tb, _round_up(pl.cdiv(B, 2), 8))
    if tb != B:
        tb = _round_up(tb, 8)                  # sublane (8) alignment
    grid = (pl.cdiv(B, tb),)

    def resident(shape):
        # Whole-array block, constant index map -> stays VMEM-resident.
        return pl.BlockSpec(shape, lambda i: (0, 0))

    mean, value = pl.pallas_call(
        ppo_forward_kernel,
        out_shape=(jax.ShapeDtypeStruct((B, 1), jnp.float32),
                   jax.ShapeDtypeStruct((B, 1), jnp.float32)),
        grid=grid,
        in_specs=[
            pl.BlockSpec((tb, state_dim), lambda i: (i, 0)),   # streamed state
            resident((state_dim, H)),                          # w1
            resident((H, H)),                                  # w2
            resident((H, H1)),                                 # fused head-1 W
            resident((H1, HEAD_W)),                            # fused head-2 W
            resident((8, H)),                                  # packed vectors
            resident((1, HEAD_W)),                             # fused head-2 bias
        ],
        out_specs=[
            pl.BlockSpec((tb, 1), lambda i: (i, 0)),           # action_mean
            pl.BlockSpec((tb, 1), lambda i: (i, 0)),           # value
        ],
        compiler_params=pltpu.CompilerParams(
            dimension_semantics=("parallel",)),
    )(state, packed["w1"], packed["w2"], packed["wh1"], packed["wh2"],
      packed["vec"], packed["bh2"])

    return mean, value


# ----------------------------------------------------------------------------
# Parameter construction (matches PyTorch init semantics) and offline packing.
# ----------------------------------------------------------------------------

def orthogonal_init(key, n_in, n_out, gain):
    """Semi-orthogonal (n_in, n_out) matrix, matching nn.init.orthogonal_
    semantics up to the transposed storage convention."""
    a = jax.random.normal(key, (max(n_in, n_out), min(n_in, n_out)), jnp.float32)
    q, r = jnp.linalg.qr(a)
    q = q * jnp.sign(jnp.diagonal(r))
    if n_in < n_out:
        q = q.T
    return (gain * q).astype(jnp.float32)


def init_params(key, state_dim, hidden_dim):
    gain = float(np.sqrt(2.0))
    half = hidden_dim // 2
    ks = jax.random.split(key, 6)
    return {
        # state_encoder
        "w1": orthogonal_init(ks[0], state_dim, hidden_dim, gain),
        "b1": jnp.zeros((1, hidden_dim), jnp.float32),
        "g1": jnp.ones((1, hidden_dim), jnp.float32),
        "be1": jnp.zeros((1, hidden_dim), jnp.float32),
        "w2": orthogonal_init(ks[1], hidden_dim, hidden_dim, gain),
        "b2": jnp.zeros((1, hidden_dim), jnp.float32),
        "g2": jnp.ones((1, hidden_dim), jnp.float32),
        "be2": jnp.zeros((1, hidden_dim), jnp.float32),
        # actor_mean head
        "wa1": orthogonal_init(ks[2], hidden_dim, half, gain),
        "ba1": jnp.zeros((1, half), jnp.float32),
        "wa2": orthogonal_init(ks[3], half, 1, gain),
        "ba2": jnp.zeros((1, 1), jnp.float32),
        # critic head
        "wc1": orthogonal_init(ks[4], hidden_dim, half, gain),
        "bc1": jnp.zeros((1, half), jnp.float32),
        "wc2": orthogonal_init(ks[5], half, 1, gain),
        "bc2": jnp.zeros((1, 1), jnp.float32),
        # action_log_std exists in the module but is unused in forward()
        "action_log_std": jnp.zeros((1,), jnp.float32),
    }


def pack_params(p, hidden_dim):
    """Offline fusion: pack 10 small vectors into one slab, fuse head weights."""
    assert hidden_dim % 2 == 0
    half = hidden_dim // 2
    h1 = 2 * half

    vec = jnp.zeros((8, hidden_dim), jnp.float32)
    vec = vec.at[0].set(p["b1"][0]).at[1].set(p["g1"][0]).at[2].set(p["be1"][0])
    vec = vec.at[3].set(p["b2"][0]).at[4].set(p["g2"][0]).at[5].set(p["be2"][0])
    vec = vec.at[6, :half].set(p["ba1"][0]).at[6, half:h1].set(p["bc1"][0])

    wh1 = jnp.concatenate([p["wa1"], p["wc1"]], axis=1)        # (H, 2*half)

    wh2 = jnp.zeros((h1, HEAD_W), jnp.float32)                 # block-diagonal
    wh2 = wh2.at[:half, 0].set(p["wa2"][:, 0]).at[half:, 1].set(p["wc2"][:, 0])

    bh2 = jnp.zeros((1, HEAD_W), jnp.float32)
    bh2 = bh2.at[0, 0].set(p["ba2"][0, 0]).at[0, 1].set(p["bc2"][0, 0])

    return {"w1": p["w1"], "w2": p["w2"], "wh1": wh1, "wh2": wh2,
            "vec": vec, "bh2": bh2}


def reference_forward(state, p):
    """Pure-JAX reference (unfused) for sanity check."""
    def ln(h, g, b):
        mu = h.mean(-1, keepdims=True)
        var = ((h - mu) ** 2).mean(-1, keepdims=True)
        return (h - mu) / jnp.sqrt(var + LN_EPS) * g + b

    h = jnp.maximum(ln(state @ p["w1"] + p["b1"], p["g1"], p["be1"]), 0.0)
    h = jnp.maximum(ln(h @ p["w2"] + p["b2"], p["g2"], p["be2"]), 0.0)
    a = jnp.maximum(h @ p["wa1"] + p["ba1"], 0.0)
    mean = jnp.tanh(a @ p["wa2"] + p["ba2"])
    c = jnp.maximum(h @ p["wc1"] + p["bc1"], 0.0)
    val = c @ p["wc2"] + p["bc2"]
    return mean, val


if __name__ == "__main__":
    key = jax.random.PRNGKey(0)
    k_param, k_state = jax.random.split(key)

    batch, state_dim, hidden_dim = 256, 16, 32
    params = init_params(k_param, state_dim, hidden_dim)
    packed = pack_params(params, hidden_dim)
    state = jax.random.normal(k_state, (batch, state_dim), jnp.float32)

    action_mean, value = ppo_policy_forward(state, packed)
    jax.block_until_ready((action_mean, value))

    ref_mean, ref_value = reference_forward(state, params)
    assert action_mean.shape == (batch, 1) and value.shape == (batch, 1)
    np.testing.assert_allclose(np.asarray(action_mean), np.asarray(ref_mean),
                               rtol=1e-5, atol=1e-5)
    np.testing.assert_allclose(np.asarray(value), np.asarray(ref_value),
                               rtol=1e-5, atol=1e-5)

    # Second check with non-trivial biases / LN affine params so the packing
    # and head-fusion paths are exercised beyond the zero-bias PyTorch init.
    kb = jax.random.PRNGKey(1)
    noisy = dict(params)
    for i, name in enumerate(["b1", "g1", "be1", "b2", "g2", "be2",
                              "ba1", "bc1", "ba2", "bc2"]):
        noisy[name] = params[name] + 0.1 * jax.random.normal(
            jax.random.fold_in(kb, i), params[name].shape, jnp.float32)
    m2, v2 = ppo_policy_forward(state, pack_params(noisy, hidden_dim))
    jax.block_until_ready((m2, v2))
    rm2, rv2 = reference_forward(state, noisy)
    np.testing.assert_allclose(np.asarray(m2), np.asarray(rm2),
                               rtol=1e-5, atol=1e-5)
    np.testing.assert_allclose(np.asarray(v2), np.asarray(rv2),
                               rtol=1e-5, atol=1e-5)

    print("KERNEL_OK")
</pallas_src>

<mosaic_0001>
module attributes {stable_mosaic.version = 11 : i64} {
  func.func @ppo_forward_kernel(%arg0: i32, %arg1: memref<128x16xf32, #tpu.memory_space<vmem>>, %arg2: memref<16x32xf32, #tpu.memory_space<vmem>>, %arg3: memref<32x32xf32, #tpu.memory_space<vmem>>, %arg4: memref<32x32xf32, #tpu.memory_space<vmem>>, %arg5: memref<32x8xf32, #tpu.memory_space<vmem>>, %arg6: memref<8x32xf32, #tpu.memory_space<vmem>>, %arg7: memref<1x8xf32, #tpu.memory_space<vmem>>, %arg8: memref<128x1xf32, #tpu.memory_space<vmem>>, %arg9: memref<128x1xf32, #tpu.memory_space<vmem>>) attributes {dimension_semantics = [#tpu.dimension_semantics<parallel>], iteration_bounds = array<i64: 2>, scalar_prefetch = 0 : i64, scratch_operands = 0 : i64, tpu.core_type = #tpu.core_type<tc>, window_params = [{transform_indices = @transform_0, window_bounds = array<i64: 128, 16>}, {pipeline_mode = #tpu.pipeline_mode<synchronous>, transform_indices = @transform_1, window_bounds = array<i64: 16, 32>}, {pipeline_mode = #tpu.pipeline_mode<synchronous>, transform_indices = @transform_2, window_bounds = array<i64: 32, 32>}, {pipeline_mode = #tpu.pipeline_mode<synchronous>, transform_indices = @transform_3, window_bounds = array<i64: 32, 32>}, {pipeline_mode = #tpu.pipeline_mode<synchronous>, transform_indices = @transform_4, window_bounds = array<i64: 32, 8>}, {pipeline_mode = #tpu.pipeline_mode<synchronous>, transform_indices = @transform_5, window_bounds = array<i64: 8, 32>}, {pipeline_mode = #tpu.pipeline_mode<synchronous>, transform_indices = @transform_6, window_bounds = array<i64: 1, 8>}, {transform_indices = @transform_7, window_bounds = array<i64: 128, 1>}, {transform_indices = @transform_8, window_bounds = array<i64: 128, 1>}]} {
    %c0 = arith.constant 0 : index
    %c0_0 = arith.constant 0 : index
    %0 = vector.load %arg6[%c0, %c0_0] : memref<8x32xf32, #tpu.memory_space<vmem>>, vector<1x32xf32>
    %c1 = arith.constant 1 : index
    %c0_1 = arith.constant 0 : index
    %1 = vector.load %arg6[%c1, %c0_1] : memref<8x32xf32, #tpu.memory_space<vmem>>, vector<1x32xf32>
    %c2 = arith.constant 2 : index
    %c0_2 = arith.constant 0 : index
    %2 = vector.load %arg6[%c2, %c0_2] : memref<8x32xf32, #tpu.memory_space<vmem>>, vector<1x32xf32>
    %c3 = arith.constant 3 : index
    %c0_3 = arith.constant 0 : index
    %3 = vector.load %arg6[%c3, %c0_3] : memref<8x32xf32, #tpu.memory_space<vmem>>, vector<1x32xf32>
    %c4 = arith.constant 4 : index
    %c0_4 = arith.constant 0 : index
    %4 = vector.load %arg6[%c4, %c0_4] : memref<8x32xf32, #tpu.memory_space<vmem>>, vector<1x32xf32>
    %c5 = arith.constant 5 : index
    %c0_5 = arith.constant 0 : index
    %5 = vector.load %arg6[%c5, %c0_5] : memref<8x32xf32, #tpu.memory_space<vmem>>, vector<1x32xf32>
    %c6 = arith.constant 6 : index
    %c0_6 = arith.constant 0 : index
    %6 = vector.load %arg6[%c6, %c0_6] : memref<8x32xf32, #tpu.memory_space<vmem>>, vector<1x32xf32>
    %c0_7 = arith.constant 0 : index
    %c0_8 = arith.constant 0 : index
    %7 = vector.load %arg1[%c0_7, %c0_8] : memref<128x16xf32, #tpu.memory_space<vmem>>, vector<128x16xf32>
    %c0_9 = arith.constant 0 : index
    %c0_10 = arith.constant 0 : index
    %8 = vector.load %arg2[%c0_9, %c0_10] : memref<16x32xf32, #tpu.memory_space<vmem>>, vector<16x32xf32>
    %cst = arith.constant dense<0.000000e+00> : vector<128x32xf32>
    %9 = tpu.matmul %7, %8, %cst {dimension_numbers = #tpu.dot_dimension_numbers<[1], [0], [0], [1], [0, 0, 1, 1], [], []>} : vector<128x16xf32>, vector<16x32xf32>, vector<128x32xf32> -> vector<128x32xf32>
    %10 = vector.broadcast %0 : vector<1x32xf32> to vector<128x32xf32>
    %11 = arith.addf %9, %10 : vector<128x32xf32>
    %cst_11 = arith.constant dense<0.000000e+00> : vector<128xf32>
    %12 = vector.multi_reduction <add>, %11, %cst_11 [1] : vector<128x32xf32> to vector<128xf32>
    %13 = vector.shape_cast %12 : vector<128xf32> to vector<128x1xf32>
    %cst_12 = arith.constant 3.200000e+01 : f32
    %14 = vector.broadcast %cst_12 : f32 to vector<128x1xf32>
    %15 = arith.divf %13, %14 : vector<128x1xf32>
    %16 = vector.broadcast %15 : vector<128x1xf32> to vector<128x32xf32>
    %17 = arith.subf %11, %16 : vector<128x32xf32>
    %18 = arith.mulf %17, %17 : vector<128x32xf32>
    %cst_13 = arith.constant dense<0.000000e+00> : vector<128xf32>
    %19 = vector.multi_reduction <add>, %18, %cst_13 [1] : vector<128x32xf32> to vector<128xf32>
    %20 = vector.shape_cast %19 : vector<128xf32> to vector<128x1xf32>
    %cst_14 = arith.constant 3.200000e+01 : f32
    %21 = vector.broadcast %cst_14 : f32 to vector<128x1xf32>
    %22 = arith.divf %20, %21 : vector<128x1xf32>
    %cst_15 = arith.constant 9.99999974E-6 : f32
    %23 = vector.broadcast %cst_15 : f32 to vector<128x1xf32>
    %24 = arith.addf %22, %23 : vector<128x1xf32>
    %25 = math.rsqrt %24 : vector<128x1xf32>
    %26 = vector.broadcast %15 : vector<128x1xf32> to vector<128x32xf32>
    %27 = arith.subf %11, %26 : vector<128x32xf32>
    %28 = vector.broadcast %25 : vector<128x1xf32> to vector<128x32xf32>
    %29 = arith.mulf %27, %28 : vector<128x32xf32>
    %30 = vector.broadcast %1 : vector<1x32xf32> to vector<128x32xf32>
    %31 = arith.mulf %29, %30 : vector<128x32xf32>
    %32 = vector.broadcast %2 : vector<1x32xf32> to vector<128x32xf32>
    %33 = arith.addf %31, %32 : vector<128x32xf32>
    %cst_16 = arith.constant 0.000000e+00 : f32
    %34 = vector.broadcast %cst_16 : f32 to vector<128x32xf32>
    %35 = arith.maximumf %33, %34 : vector<128x32xf32>
    %c0_17 = arith.constant 0 : index
    %c0_18 = arith.constant 0 : index
    %36 = vector.load %arg3[%c0_17, %c0_18] : memref<32x32xf32, #tpu.memory_space<vmem>>, vector<32x32xf32>
    %cst_19 = arith.constant dense<0.000000e+00> : vector<128x32xf32>
    %37 = tpu.matmul %35, %36, %cst_19 {dimension_numbers = #tpu.dot_dimension_numbers<[1], [0], [0], [1], [0, 0, 1, 1], [], []>} : vector<128x32xf32>, vector<32x32xf32>, vector<128x32xf32> -> vector<128x32xf32>
    %38 = vector.broadcast %3 : vector<1x32xf32> to vector<128x32xf32>
    %39 = arith.addf %37, %38 : vector<128x32xf32>
    %cst_20 = arith.constant dense<0.000000e+00> : vector<128xf32>
    %40 = vector.multi_reduction <add>, %39, %cst_20 [1] : vector<128x32xf32> to vector<128xf32>
    %41 = vector.shape_cast %40 : vector<128xf32> to vector<128x1xf32>
    %cst_21 = arith.constant 3.200000e+01 : f32
    %42 = vector.broadcast %cst_21 : f32 to vector<128x1xf32>
    %43 = arith.divf %41, %42 : vector<128x1xf32>
    %44 = vector.broadcast %43 : vector<128x1xf32> to vector<128x32xf32>
    %45 = arith.subf %39, %44 : vector<128x32xf32>
    %46 = arith.mulf %45, %45 : vector<128x32xf32>
    %cst_22 = arith.constant dense<0.000000e+00> : vector<128xf32>
    %47 = vector.multi_reduction <add>, %46, %cst_22 [1] : vector<128x32xf32> to vector<128xf32>
    %48 = vector.shape_cast %47 : vector<128xf32> to vector<128x1xf32>
    %cst_23 = arith.constant 3.200000e+01 : f32
    %49 = vector.broadcast %cst_23 : f32 to vector<128x1xf32>
    %50 = arith.divf %48, %49 : vector<128x1xf32>
    %cst_24 = arith.constant 9.99999974E-6 : f32
    %51 = vector.broadcast %cst_24 : f32 to vector<128x1xf32>
    %52 = arith.addf %50, %51 : vector<128x1xf32>
    %53 = math.rsqrt %52 : vector<128x1xf32>
    %54 = vector.broadcast %43 : vector<128x1xf32> to vector<128x32xf32>
    %55 = arith.subf %39, %54 : vector<128x32xf32>
    %56 = vector.broadcast %53 : vector<128x1xf32> to vector<128x32xf32>
    %57 = arith.mulf %55, %56 : vector<128x32xf32>
    %58 = vector.broadcast %4 : vector<1x32xf32> to vector<128x32xf32>
    %59 = arith.mulf %57, %58 : vector<128x32xf32>
    %60 = vector.broadcast %5 : vector<1x32xf32> to vector<128x32xf32>
    %61 = arith.addf %59, %60 : vector<128x32xf32>
    %cst_25 = arith.constant 0.000000e+00 : f32
    %62 = vector.broadcast %cst_25 : f32 to vector<128x32xf32>
    %63 = arith.maximumf %61, %62 : vector<128x32xf32>
    %c0_26 = arith.constant 0 : index
    %c0_27 = arith.constant 0 : index
    %64 = vector.load %arg4[%c0_26, %c0_27] : memref<32x32xf32, #tpu.memory_space<vmem>>, vector<32x32xf32>
    %cst_28 = arith.constant dense<0.000000e+00> : vector<128x32xf32>
    %65 = tpu.matmul %63, %64, %cst_28 {dimension_numbers = #tpu.dot_dimension_numbers<[1], [0], [0], [1], [0, 0, 1, 1], [], []>} : vector<128x32xf32>, vector<32x32xf32>, vector<128x32xf32> -> vector<128x32xf32>
    %66 = vector.broadcast %6 : vector<1x32xf32> to vector<128x32xf32>
    %67 = arith.addf %65, %66 : vector<128x32xf32>
    %cst_29 = arith.constant 0.000000e+00 : f32
    %68 = vector.broadcast %cst_29 : f32 to vector<128x32xf32>
    %69 = arith.maximumf %67, %68 : vector<128x32xf32>
    %c0_30 = arith.constant 0 : index
    %c0_31 = arith.constant 0 : index
    %70 = vector.load %arg5[%c0_30, %c0_31] : memref<32x8xf32, #tpu.memory_space<vmem>>, vector<32x8xf32>
    %cst_32 = arith.constant dense<0.000000e+00> : vector<128x8xf32>
    %71 = tpu.matmul %69, %70, %cst_32 {dimension_numbers = #tpu.dot_dimension_numbers<[1], [0], [0], [1], [0, 0, 1, 1], [], []>} : vector<128x32xf32>, vector<32x8xf32>, vector<128x8xf32> -> vector<128x8xf32>
    %c0_33 = arith.constant 0 : index
    %c0_34 = arith.constant 0 : index
    %72 = vector.load %arg7[%c0_33, %c0_34] : memref<1x8xf32, #tpu.memory_space<vmem>>, vector<1x8xf32>
    %73 = vector.broadcast %72 : vector<1x8xf32> to vector<128x8xf32>
    %74 = arith.addf %71, %73 : vector<128x8xf32>
    %75 = vector.extract_strided_slice %74 {offsets = [0, 0], sizes = [128, 1], strides = [1, 1]} : vector<128x8xf32> to vector<128x1xf32>
    %76 = math.tanh %75 : vector<128x1xf32>
    %c0_35 = arith.constant 0 : index
    %c0_36 = arith.constant 0 : index
    %77 = vector.load %arg8[%c0_35, %c0_36] : memref<128x1xf32, #tpu.memory_space<vmem>>, vector<128x1xf32>
    tpu.vector_store %arg8[%c0_35, %c0_36], %76 {strides = array<i32>} : memref<128x1xf32, #tpu.memory_space<vmem>>, vector<128x1xf32>,
    %78 = vector.extract_strided_slice %74 {offsets = [0, 1], sizes = [128, 1], strides = [1, 1]} : vector<128x8xf32> to vector<128x1xf32>
    %c0_37 = arith.constant 0 : index
    %c0_38 = arith.constant 0 : index
    %79 = vector.load %arg9[%c0_37, %c0_38] : memref<128x1xf32, #tpu.memory_space<vmem>>, vector<128x1xf32>
    tpu.vector_store %arg9[%c0_37, %c0_38], %78 {strides = array<i32>} : memref<128x1xf32, #tpu.memory_space<vmem>>, vector<128x1xf32>,
    return
  }
  func.func @transform_0(%arg0: i32) -> (i32, i32) {
    %c0_i32 = arith.constant 0 : i32
    %c0_i32_0 = arith.constant 0 : i32
    return %arg0, %c0_i32 : i32, i32
  }
  func.func @transform_1(%arg0: i32) -> (i32, i32) {
    %c0_i32 = arith.constant 0 : i32
    %c0_i32_0 = arith.constant 0 : i32
    %c0_i32_1 = arith.constant 0 : i32
    return %c0_i32, %c0_i32_0 : i32, i32
  }
  func.func @transform_2(%arg0: i32) -> (i32, i32) {
    %c0_i32 = arith.constant 0 : i32
    %c0_i32_0 = arith.constant 0 : i32
    %c0_i32_1 = arith.constant 0 : i32
    return %c0_i32, %c0_i32_0 : i32, i32
  }
  func.func @transform_3(%arg0: i32) -> (i32, i32) {
    %c0_i32 = arith.constant 0 : i32
    %c0_i32_0 = arith.constant 0 : i32
    %c0_i32_1 = arith.constant 0 : i32
    return %c0_i32, %c0_i32_0 : i32, i32
  }
  func.func @transform_4(%arg0: i32) -> (i32, i32) {
    %c0_i32 = arith.constant 0 : i32
    %c0_i32_0 = arith.constant 0 : i32
    %c0_i32_1 = arith.constant 0 : i32
    return %c0_i32, %c0_i32_0 : i32, i32
  }
  func.func @transform_5(%arg0: i32) -> (i32, i32) {
    %c0_i32 = arith.constant 0 : i32
    %c0_i32_0 = arith.constant 0 : i32
    %c0_i32_1 = arith.constant 0 : i32
    return %c0_i32, %c0_i32_0 : i32, i32
  }
  func.func @transform_6(%arg0: i32) -> (i32, i32) {
    %c0_i32 = arith.constant 0 : i32
    %c0_i32_0 = arith.constant 0 : i32
    %c0_i32_1 = arith.constant 0 : i32
    return %c0_i32, %c0_i32_0 : i32, i32
  }
  func.func @transform_7(%arg0: i32) -> (i32, i32) {
    %c0_i32 = arith.constant 0 : i32
    %c0_i32_0 = arith.constant 0 : i32
    return %arg0, %c0_i32 : i32, i32
  }
  func.func @transform_8(%arg0: i32) -> (i32, i32) {
    %c0_i32 = arith.constant 0 : i32
    %c0_i32_0 = arith.constant 0 : i32
    return %arg0, %c0_i32 : i32, i32
  }
}

</mosaic_0001>

<llo_original>
// kernel: tpu_custom_call.1
$region0: #{tpu_custom_call.1}
  #allocation0 [shape = 'u32[]', space=smem, size = 0x4, offset = 0x4, fixed_abs, tag = 'smem constant byte address 0x4 - core index']
  #allocation1 [shape = 'u32[144,128]{1,0:T(1,128)}', space=vmem, size = 0x12000, scoped, tag = 'internal scratch']
  %s0 = inlined_call_operand.vmem [shape: f32[256,16], index: 0, kind: input, shape index: {}]
  %s1 = inlined_call_operand.vmem [shape: f32[16,32], index: 1, kind: input, shape index: {}]
  %s2 = inlined_call_operand.vmem [shape: f32[32,32], index: 2, kind: input, shape index: {}]
  %s3 = inlined_call_operand.vmem [shape: f32[32,32], index: 3, kind: input, shape index: {}]
  %s4 = inlined_call_operand.vmem [shape: f32[32,8], index: 4, kind: input, shape index: {}]
  %s5 = inlined_call_operand.vmem [shape: f32[8,32], index: 5, kind: input, shape index: {}]
  %s6 = inlined_call_operand.vmem [shape: f32[1,8], index: 6, kind: input, shape index: {}]
  %s7 = inlined_call_operand.vmem [shape: f32[256,1], index: 7, kind: output, shape index: {0}]
  %s8 = inlined_call_operand.vmem [shape: f32[256,1], index: 8, kind: output, shape index: {1}]
  %9 = xla_tuple %s7, %s8
  %s10 = sld [smem:[#allocation0]]
  $region69: #{tpu_custom_call.1} parent=0
    _
  %s12 = ssub.s32 1, %s10
  %s13 = scalar_select 0, %s12, %s10
  loop: start=0, step=1, limit=4
  $region2: #{tpu_custom_call.1} parent=0 // loop_pre_header
    _
  $region3: #{tpu_custom_call.1} parent=0 // loop_header
    %s15 = sphi 0, %s19
    %p16 = scmp.ge.s32.totalorder %s15, 4
    %s25 = sphi 0, %s27
    %s28 = sphi 0, %s25
    %s29 = sphi 0, %s28
    %s45 = sphi 0, %s29
    %s49 = sphi 0, %s49
    %s51 = sphi 0, %s49
    %s52 = sphi 0, %s51
    %s66 = sphi 0, %s52
    %s70 = sphi 0, %s70
    %s72 = sphi 0, %s70
    %s73 = sphi 0, %s72
    %s87 = sphi 0, %s73
    %s91 = sphi 0, %s91
    %s93 = sphi 0, %s91
    %s94 = sphi 0, %s93
    %s108 = sphi 0, %s94
    %s112 = sphi 0, %s112
    %s114 = sphi 0, %s112
    %s115 = sphi 0, %s114
    %s129 = sphi 0, %s115
    %s133 = sphi 0, %s133
    %s135 = sphi 0, %s133
    %s136 = sphi 0, %s135
    %s150 = sphi 0, %s136
    %s154 = sphi 0, %s154
    %s156 = sphi 0, %s154
    %s157 = sphi 0, %s156
    %s171 = sphi 0, %s157
    %s177 = sphi 0, %s179
    %s180 = sphi 0, %s177
    %s181 = sphi 0, %s180
    %s197 = sphi 0, %s181
    %s203 = sphi 0, %s205
    %s206 = sphi 0, %s203
    %s207 = sphi 0, %s206
    %s223 = sphi 0, %s207
  $region4: #{tpu_custom_call.1} parent=0 // loop_header_branch
    %18 = sbr.rel (%p16) target = $region8
  $region5: #{tpu_custom_call.1} parent=0 // loop_body
    %s20 = ssub.s32 %s15, 1
    %s21 = ssub.s32 %s15, 2
    %s22 = sadd.s32 %s15, 1
    %s23 = ssub.s32 %s15, %s22
    %p24 = scmp.eq.s32.totalorder %s23, 0
    %s26 = sadd.s32 %s25, 1
    %s27 = scalar_select %p24, %s25, %s26
    %p30 = pneg %p24
    %p31 = scmp.eq.s32.totalorder %s15, 1
    %p32 = por %p30, %p31
    %p33 = scmp.ne.s32.totalorder %s25, %s28
    %p34 = scmp.eq.s32.totalorder %s15, 0
    %p35 = por %p33, %p34
    %p36 = scmp.ne.s32.totalorder %s25, %s28
    %p37 = scmp.eq.s32.totalorder %s20, 1
    %p38 = por %p36, %p37
    %p39 = scmp.ne.s32.totalorder %s28, %s29
    %p40 = scmp.eq.s32.totalorder %s20, 0
    %p41 = por %p39, %p40
    %p42 = scmp.ne.s32.totalorder %s28, %s29
    %p43 = scmp.eq.s32.totalorder %s21, 1
    %p44 = por %p42, %p43
    %p46 = scmp.ne.s32.totalorder %s29, %s45
    %p47 = scmp.eq.s32.totalorder %s21, 0
    %p48 = por %p46, %p47
    %s50 = sadd.s32 %s49, 1
    %p53 = scmp.eq.s32.totalorder %s15, 1
    %p54 = scmp.ne.s32.totalorder %s49, %s51
    %p55 = scmp.eq.s32.totalorder %s15, 0
    %p56 = por %p54, %p55
    %p57 = scmp.ne.s32.totalorder %s49, %s51
    %p58 = scmp.eq.s32.totalorder %s20, 1
    %p59 = por %p57, %p58
    %p60 = scmp.ne.s32.totalorder %s51, %s52
    %p61 = scmp.eq.s32.totalorder %s20, 0
    %p62 = por %p60, %p61
    %p63 = scmp.ne.s32.totalorder %s51, %s52
    %p64 = scmp.eq.s32.totalorder %s21, 1
    %p65 = por %p63, %p64
    %p67 = scmp.ne.s32.totalorder %s52, %s66
    %p68 = scmp.eq.s32.totalorder %s21, 0
    %p69 = por %p67, %p68
    %s71 = sadd.s32 %s70, 1
    %p74 = scmp.eq.s32.totalorder %s15, 1
    %p75 = scmp.ne.s32.totalorder %s70, %s72
    %p76 = scmp.eq.s32.totalorder %s15, 0
    %p77 = por %p75, %p76
    %p78 = scmp.ne.s32.totalorder %s70, %s72
    %p79 = scmp.eq.s32.totalorder %s20, 1
    %p80 = por %p78, %p79
    %p81 = scmp.ne.s32.totalorder %s72, %s73
    %p82 = scmp.eq.s32.totalorder %s20, 0
    %p83 = por %p81, %p82
    %p84 = scmp.ne.s32.totalorder %s72, %s73
    %p85 = scmp.eq.s32.totalorder %s21, 1
    %p86 = por %p84, %p85
    %p88 = scmp.ne.s32.totalorder %s73, %s87
    %p89 = scmp.eq.s32.totalorder %s21, 0
    %p90 = por %p88, %p89
    %s92 = sadd.s32 %s91, 1
    %p95 = scmp.eq.s32.totalorder %s15, 1
    %p96 = scmp.ne.s32.totalorder %s91, %s93
    %p97 = scmp.eq.s32.totalorder %s15, 0
    %p98 = por %p96, %p97
    %p99 = scmp.ne.s32.totalorder %s91, %s93
    %p100 = scmp.eq.s32.totalorder %s20, 1
    %p101 = por %p99, %p100
    %p102 = scmp.ne.s32.totalorder %s93, %s94
    %p103 = scmp.eq.s32.totalorder %s20, 0
    %p104 = por %p102, %p103
    %p105 = scmp.ne.s32.totalorder %s93, %s94
    %p106 = scmp.eq.s32.totalorder %s21, 1
    %p107 = por %p105, %p106
    %p109 = scmp.ne.s32.totalorder %s94, %s108
    %p110 = scmp.eq.s32.totalorder %s21, 0
    %p111 = por %p109, %p110
    %s113 = sadd.s32 %s112, 1
    %p116 = scmp.eq.s32.totalorder %s15, 1
    %p117 = scmp.ne.s32.totalorder %s112, %s114
    %p118 = scmp.eq.s32.totalorder %s15, 0
    %p119 = por %p117, %p118
    %p120 = scmp.ne.s32.totalorder %s112, %s114
    %p121 = scmp.eq.s32.totalorder %s20, 1
    %p122 = por %p120, %p121
    %p123 = scmp.ne.s32.totalorder %s114, %s115
    %p124 = scmp.eq.s32.totalorder %s20, 0
    %p125 = por %p123, %p124
    %p126 = scmp.ne.s32.totalorder %s114, %s115
    %p127 = scmp.eq.s32.totalorder %s21, 1
    %p128 = por %p126, %p127
    %p130 = scmp.ne.s32.totalorder %s115, %s129
    %p131 = scmp.eq.s32.totalorder %s21, 0
    %p132 = por %p130, %p131
    %s134 = sadd.s32 %s133, 1
    %p137 = scmp.eq.s32.totalorder %s15, 1
    %p138 = scmp.ne.s32.totalorder %s133, %s135
    %p139 = scmp.eq.s32.totalorder %s15, 0
    %p140 = por %p138, %p139
    %p141 = scmp.ne.s32.totalorder %s133, %s135
    %p142 = scmp.eq.s32.totalorder %s20, 1
    %p143 = por %p141, %p142
    %p144 = scmp.ne.s32.totalorder %s135, %s136
    %p145 = scmp.eq.s32.totalorder %s20, 0
    %p146 = por %p144, %p145
    %p147 = scmp.ne.s32.totalorder %s135, %s136
    %p148 = scmp.eq.s32.totalorder %s21, 1
    %p149 = por %p147, %p148
    %p151 = scmp.ne.s32.totalorder %s136, %s150
    %p152 = scmp.eq.s32.totalorder %s21, 0
    %p153 = por %p151, %p152
    %s155 = sadd.s32 %s154, 1
    %p158 = scmp.eq.s32.totalorder %s15, 1
    %p159 = scmp.ne.s32.totalorder %s154, %s156
    %p160 = scmp.eq.s32.totalorder %s15, 0
    %p161 = por %p159, %p160
    %p162 = scmp.ne.s32.totalorder %s154, %s156
    %p163 = scmp.eq.s32.totalorder %s20, 1
    %p164 = por %p162, %p163
    %p165 = scmp.ne.s32.totalorder %s156, %s157
    %p166 = scmp.eq.s32.totalorder %s20, 0
    %p167 = por %p165, %p166
    %p168 = scmp.ne.s32.totalorder %s156, %s157
    %p169 = scmp.eq.s32.totalorder %s21, 1
    %p170 = por %p168, %p169
    %p172 = scmp.ne.s32.totalorder %s157, %s171
    %p173 = scmp.eq.s32.totalorder %s21, 0
    %p174 = por %p172, %p173
    %s175 = ssub.s32 %s15, %s22
    %p176 = scmp.eq.s32.totalorder %s175, 0
    %s178 = sadd.s32 %s177, 1
    %s179 = scalar_select %p176, %s177, %s178
    %p182 = pneg %p176
    %p183 = scmp.eq.s32.totalorder %s15, 1
    %p184 = por %p182, %p183
    %p185 = scmp.ne.s32.totalorder %s177, %s180
    %p186 = scmp.eq.s32.totalorder %s15, 0
    %p187 = por %p185, %p186
    %p188 = scmp.ne.s32.totalorder %s177, %s180
    %p189 = scmp.eq.s32.totalorder %s20, 1
    %p190 = por %p188, %p189
    %p191 = scmp.ne.s32.totalorder %s180, %s181
    %p192 = scmp.eq.s32.totalorder %s20, 0
    %p193 = por %p191, %p192
    %p194 = scmp.ne.s32.totalorder %s180, %s181
    %p195 = scmp.eq.s32.totalorder %s21, 1
    %p196 = por %p194, %p195
    %p198 = scmp.ne.s32.totalorder %s181, %s197
    %p199 = scmp.eq.s32.totalorder %s21, 0
    %p200 = por %p198, %p199
    %s201 = ssub.s32 %s15, %s22
    %p202 = scmp.eq.s32.totalorder %s201, 0
    %s204 = sadd.s32 %s203, 1
    %s205 = scalar_select %p202, %s203, %s204
    %p208 = pneg %p202
    %p209 = scmp.eq.s32.totalorder %s15, 1
    %p210 = por %p208, %p209
    %p211 = scmp.ne.s32.totalorder %s203, %s206
    %p212 = scmp.eq.s32.totalorder %s15, 0
    %p213 = por %p211, %p212
    %p214 = scmp.ne.s32.totalorder %s203, %s206
    %p215 = scmp.eq.s32.totalorder %s20, 1
    %p216 = por %p214, %p215
    %p217 = scmp.ne.s32.totalorder %s206, %s207
    %p218 = scmp.eq.s32.totalorder %s20, 0
    %p219 = por %p217, %p218
    %p220 = scmp.ne.s32.totalorder %s206, %s207
    %p221 = scmp.eq.s32.totalorder %s21, 1
    %p222 = por %p220, %p221
    %p224 = scmp.ne.s32.totalorder %s207, %s223
    %p225 = scmp.eq.s32.totalorder %s21, 0
    %p226 = por %p224, %p225
    %p227 = scmp.le.s32.totalorder 1, %s15
    %p228 = scmp.lt.s32.totalorder %s15, 3
    %p229 = pnand %p227, %p228
    %p230 = pneg %p229
    // Predicated region
    $region9: #{tpu_custom_call.1} parent=5 // pred_check
      _
    $region10: #{tpu_custom_call.1} parent=5 // pred_check_branch
      %232 = sbr.rel (%p229) target = $region12
    $region11: #{tpu_custom_call.1} parent=5 // pred_region
      %s233 = ssub.s32 %s15, 1
      // Predicated region
      $region13: #{tpu_custom_call.1} parent=11 // pred_check
        %p234 = pneg %p62
      $region14: #{tpu_custom_call.1} parent=11 // pred_check_branch
        %236 = sbr.rel (%p234) target = $region16
      $region15: #{tpu_custom_call.1} parent=11 // pred_region
        _
      $region16: #{tpu_custom_call.1} parent=11 // pred_fallthru
        _
      // Predicated region
      $region17: #{tpu_custom_call.1} parent=11 // pred_check
        %p237 = pneg %p83
      $region18: #{tpu_custom_call.1} parent=11 // pred_check_branch
        %239 = sbr.rel (%p237) target = $region20
      $region19: #{tpu_custom_call.1} parent=11 // pred_region
        _
      $region20: #{tpu_custom_call.1} parent=11 // pred_fallthru
        _
      // Predicated region
      $region21: #{tpu_custom_call.1} parent=11 // pred_check
        %p240 = pneg %p104
      $region22: #{tpu_custom_call.1} parent=11 // pred_check_branch
        %242 = sbr.rel (%p240) target = $region24
      $region23: #{tpu_custom_call.1} parent=11 // pred_region
        _
      $region24: #{tpu_custom_call.1} parent=11 // pred_fallthru
        _
      // Predicated region
      $region25: #{tpu_custom_call.1} parent=11 // pred_check
        %p243 = pneg %p125
      $region26: #{tpu_custom_call.1} parent=11 // pred_check_branch
        %245 = sbr.rel (%p243) target = $region28
      $region27: #{tpu_custom_call.1} parent=11 // pred_region
        _
      $region28: #{tpu_custom_call.1} parent=11 // pred_fallthru
        _
      // Predicated region
      $region29: #{tpu_custom_call.1} parent=11 // pred_check
        %p246 = pneg %p146
      $region30: #{tpu_custom_call.1} parent=11 // pred_check_branch
        %248 = sbr.rel (%p246) target = $region32
      $region31: #{tpu_custom_call.1} parent=11 // pred_region
        _
      $region32: #{tpu_custom_call.1} parent=11 // pred_fallthru
        _
      // Predicated region
      $region33: #{tpu_custom_call.1} parent=11 // pred_check
        %p249 = pneg %p167
      $region34: #{tpu_custom_call.1} parent=11 // pred_check_branch
        %251 = sbr.rel (%p249) target = $region36
      $region35: #{tpu_custom_call.1} parent=11 // pred_region
        _
      $region36: #{tpu_custom_call.1} parent=11 // pred_fallthru
        _
    $region12: #{tpu_custom_call.1} parent=5 // pred_fallthru
      _
    %p252 = scmp.lt.s32.totalorder %s15, 2
    // Predicated region
    $region37: #{tpu_custom_call.1} parent=5 // pred_check
      %p253 = pneg %p252
    $region38: #{tpu_custom_call.1} parent=5 // pred_check_branch
      %255 = sbr.rel (%p253) target = $region40
    $region39: #{tpu_custom_call.1} parent=5 // pred_region
      // Predicated region
      $region41: #{tpu_custom_call.1} parent=39 // pred_check
        %p256 = pneg %p35
      $region42: #{tpu_custom_call.1} parent=39 // pred_check_branch
        %258 = sbr.rel (%p256) target = $region44
      $region43: #{tpu_custom_call.1} parent=39 // pred_region
        %s259 = smul.u32 16, %s15
        %p260 = scmp.lt.s32.totalorder %s259, 31
        %s261 = scalar_select %p260, %s259, 31
        %s262 = smul.addr %s261, 8
        %s263 = scalar_lea.vmem %s0, %s262
        %s264 = smul.u32 16, %s15
      $region44: #{tpu_custom_call.1} parent=39 // pred_fallthru
        _
    $region40: #{tpu_custom_call.1} parent=5 // pred_fallthru
      _
    %p265 = scmp.le.s32.totalorder 1, %s15
    %p266 = scmp.lt.s32.totalorder %s15, 3
    %p267 = pnand %p265, %p266
    %p268 = pneg %p267
    // Predicated region
    $region45: #{tpu_custom_call.1} parent=5 // pred_check
      _
    $region46: #{tpu_custom_call.1} parent=5 // pred_check_branch
      %270 = sbr.rel (%p267) target = $region48
    $region47: #{tpu_custom_call.1} parent=5 // pred_region
      %s271 = ssub.s32 %s15, 1
      %s272 = smul.u32 16, %s20
      %p273 = scmp.lt.s32.totalorder %s272, 31
      %s274 = scalar_select %p273, %s272, 31
      %s275 = smul.addr %s274, 8
      %s276 = scalar_lea.vmem %s0, %s275
      %p277 = pneg %p41
      %p278 = pneg %p38
      %p279 = pneg %p62
      %p280 = pneg %p59
      %p281 = pneg %p83
      %p282 = pneg %p80
      %p283 = pneg %p104
      %p284 = pneg %p101
      %p285 = pneg %p125
      %p286 = pneg %p122
      %p287 = pneg %p146
      %p288 = pneg %p143
      %p289 = pneg %p167
      %p290 = pneg %p164
      %p291 = pneg %p193
      %p292 = pneg %p190
      %s293 = smul.u32 16, %s20
      %p294 = scmp.lt.s32.totalorder %s293, 31
      %s295 = scalar_select %p294, %s293, 31
      %s296 = smul.addr %s295, 8
      %s297 = scalar_lea.vmem %s7, %s296
      %p298 = pneg %p219
      %p299 = pneg %p216
      %s300 = smul.u32 16, %s20
      %p301 = scmp.lt.s32.totalorder %s300, 31
      %s302 = scalar_select %p301, %s300, 31
      %s303 = smul.addr %s302, 8
      %s304 = scalar_lea.vmem %s8, %s303
      %s305 = smul.u32 16, %s20
      %p306 = scmp.lt.s32.totalorder %s305, 31
      %s307 = scalar_select %p306, %s305, 31
      %s308 = smul.addr %s307, 8
      %s309 = scalar_lea.vmem %s0, %s308
      %s310 = smul.u32 16, %s20
      %s311 = smul.u32 16, %s20
      %p312 = scmp.lt.s32.totalorder %s311, 31
      %s313 = scalar_select %p312, %s311, 31
      %s314 = smul.addr %s313, 8
      %s315 = scalar_lea.vmem %s7, %s314
      %s316 = smul.u32 16, %s20
      %s317 = smul.u32 16, %s20
      %p318 = scmp.lt.s32.totalorder %s317, 31
      %s319 = scalar_select %p318, %s317, 31
      %s320 = smul.addr %s319, 8
      %s321 = scalar_lea.vmem %s8, %s320
      %s322 = smul.u32 16, %s20
      %v323 = vld [vmem:[%s5] sm:$0x1]
      %v324 = vld [vmem:[%s5 + $0x1] sm:$0x1]
      %v325 = vld [vmem:[%s5 + $0x2] sm:$0x1]
      %v326 = vld [vmem:[%s5 + $0x3] sm:$0x1]
      %v327 = vld [vmem:[%s5 + $0x4] sm:$0x1]
      %v328 = vld [vmem:[%s5 + $0x5] sm:$0x1]
      %v329 = vld [vmem:[%s5 + $0x6] sm:$0x1]
      %v330 = vld [vmem:[%s309] sm:$0xff]
      %v331 = vld [vmem:[%s309 + $0x8] sm:$0xff]
      %v332 = vld [vmem:[%s309 + $0x10] sm:$0xff]
      %v333 = vld [vmem:[%s309 + $0x18] sm:$0xff]
      %v334 = vld [vmem:[%s309 + $0x20] sm:$0xff]
      %v335 = vld [vmem:[%s309 + $0x28] sm:$0xff]
      %v336 = vld [vmem:[%s309 + $0x30] sm:$0xff]
      %v337 = vld [vmem:[%s309 + $0x38] sm:$0xff]
      %v338 = vld [vmem:[%s309 + $0x40] sm:$0xff]
      %v339 = vld [vmem:[%s309 + $0x48] sm:$0xff]
      %v340 = vld [vmem:[%s309 + $0x50] sm:$0xff]
      %v341 = vld [vmem:[%s309 + $0x58] sm:$0xff]
      %v342 = vld [vmem:[%s309 + $0x60] sm:$0xff]
      %v343 = vld [vmem:[%s309 + $0x68] sm:$0xff]
      %v344 = vld [vmem:[%s309 + $0x70] sm:$0xff]
      %v345 = vld [vmem:[%s309 + $0x78] sm:$0xff]
      %v346 = vld [vmem:[%s1] sm:$0xff]
      %v347 = vld [vmem:[%s1 + $0x8] sm:$0xff]
      %v348 = vlaneseq
      %v349 = vshrl.u32 %v348, 7
      %v350 = vsub.s32 0, %v349
      %v351 = vrot.slane %v323, %v350
      %vm352 = vcmask 130048
      %v354 = vsel %vm352, %v330, 0
      %v357 = vsel %vm352, %v331, 0
      %v360 = vsel %vm352, %v332, 0
      %v363 = vsel %vm352, %v333, 0
      %v366 = vsel %vm352, %v334, 0
      %v369 = vsel %vm352, %v335, 0
      %v372 = vsel %vm352, %v336, 0
      %v375 = vsel %vm352, %v337, 0
      %v378 = vsel %vm352, %v338, 0
      %v381 = vsel %vm352, %v339, 0
      %v384 = vsel %vm352, %v340, 0
      %v387 = vsel %vm352, %v341, 0
      %v390 = vsel %vm352, %v342, 0
      %v393 = vsel %vm352, %v343, 0
      %v396 = vsel %vm352, %v344, 0
      %v399 = vsel %vm352, %v345, 0
      %401 = vmatprep.subr.mxu0 0.0
      %402 = vmatpush1.msra.mxu0 %v346
      %403 = vmatprep.subr.mxu0 0.0
      %404 = vmatpush1.msra.mxu0 %v347
      %405 = vmatprep.subr.mxu0 0.0
      %406 = vmatpush1.msra.mxu0 0.0
      %407 = vmatprep.subr.mxu0 0.0
      %408 = vmatpush1.msra.mxu0 0.0
      %409 = vmatprep.subr.mxu0 0.0
      %410 = vmatpush1.msra.mxu0 0.0
      %411 = vmatprep.subr.mxu0 0.0
      %412 = vmatpush1.msra.mxu0 0.0
      %413 = vmatprep.subr.mxu0 0.0
      %414 = vmatpush1.msra.mxu0 0.0
      %415 = vmatprep.subr.mxu0 0.0
      %416 = vmatpush1.msra.mxu0 0.0
      %417 = vmatprep.subr.mxu0 0.0
      %418 = vmatpush1.msra.mxu0 0.0
      %419 = vmatprep.subr.mxu0 0.0
      %420 = vmatpush1.msra.mxu0 0.0
      %421 = vmatprep.subr.mxu0 0.0
      %422 = vmatpush1.msra.mxu0 0.0
      %423 = vmatprep.subr.mxu0 0.0
      %424 = vmatpush1.msra.mxu0 0.0
      %425 = vmatprep.subr.mxu0 0.0
      %426 = vmatpush1.msra.mxu0 0.0
      %427 = vmatprep.subr.mxu0 0.0
      %428 = vmatpush1.msra.mxu0 0.0
      %429 = vmatprep.subr.mxu0 0.0
      %430 = vmatpush1.msra.mxu0 0.0
      %431 = vmatprep.subr.mxu0 0.0
      %432 = vmatpush1.msra.mxu0 0.0
      %433 = vmatprep.subr.mxu0 0.0
      %434 = vmatpush1.msra.mxu0 0.0
      %435 = vmatprep.subr.mxu0 0.0
      %436 = vmatpush1.msra.mxu0 0.0
      %437 = vmatprep.subr.mxu0 0.0
      %438 = vmatpush1.msra.mxu0 0.0
      %439 = vmatprep.subr.mxu0 0.0
      %440 = vmatpush1.msra.mxu0 0.0
      %441 = vmatprep.subr.mxu0 0.0
      %442 = vmatpush1.msra.mxu0 0.0
      %443 = vmatprep.subr.mxu0 0.0
      %444 = vmatpush1.msra.mxu0 0.0
      %445 = vmatprep.subr.mxu0 0.0
      %446 = vmatpush1.msra.mxu0 0.0
      %447 = vmatprep.subr.mxu0 0.0
      %448 = vmatpush1.msra.mxu0 0.0
      %449 = vmatprep.subr.mxu0 0.0
      %450 = vmatpush1.msra.mxu0 0.0
      %451 = vmatprep.subr.mxu0 0.0
      %452 = vmatpush1.msra.mxu0 0.0
      %453 = vmatprep.subr.mxu0 0.0
      %454 = vmatpush1.msra.mxu0 0.0
      %455 = vmatprep.subr.mxu0 0.0
      %456 = vmatpush1.msra.mxu0 0.0
      %457 = vmatprep.subr.mxu0 0.0
      %458 = vmatpush1.msra.mxu0 0.0
      %459 = vmatprep.subr.mxu0 0.0
      %460 = vmatpush1.msra.mxu0 0.0
      %461 = vmatprep.subr.mxu0 0.0
      %462 = vmatpush1.msra.mxu0 0.0
      %463 = vmatprep.subr.mxu0 0.0
      %464 = vmatpush1.msra.mxu0 0.0
      %465 = vmatprep.mubr.f32.mxu0 0.0
      %466 = vmatmul.mubr.f32.gmra.mrb[0].mxu0 %v354
      %v467 = vpop.f32.mrb[0].mxu0
      %v468 = vadd.f32 %v351, %v467
      %v469 = vpop.f32.mrb[0].mxu0
      %470 = vmatprep.mubr.f32.mxu0 0.0
      %471 = vmatmul.mubr.f32.gmra.mrb[0].mxu0 %v357
      %v472 = vpop.f32.mrb[0].mxu0
      %v473 = vadd.f32 %v351, %v472
      %v474 = vpop.f32.mrb[0].mxu0
      %475 = vmatprep.mubr.f32.mxu0 0.0
      %476 = vmatmul.mubr.f32.gmra.mrb[0].mxu0 %v360
      %v477 = vpop.f32.mrb[0].mxu0
      %v478 = vadd.f32 %v351, %v477
      %v479 = vpop.f32.mrb[0].mxu0
      %480 = vmatprep.mubr.f32.mxu0 0.0
      %481 = vmatmul.mubr.f32.gmra.mrb[0].mxu0 %v363
      %v482 = vpop.f32.mrb[0].mxu0
      %v483 = vadd.f32 %v351, %v482
      %v484 = vpop.f32.mrb[0].mxu0
      %485 = vmatprep.mubr.f32.mxu0 0.0
      %486 = vmatmul.mubr.f32.gmra.mrb[0].mxu0 %v366
      %v487 = vpop.f32.mrb[0].mxu0
      %v488 = vadd.f32 %v351, %v487
      %v489 = vpop.f32.mrb[0].mxu0
      %490 = vmatprep.mubr.f32.mxu0 0.0
      %491 = vmatmul.mubr.f32.gmra.mrb[0].mxu0 %v369
      %v492 = vpop.f32.mrb[0].mxu0
      %v493 = vadd.f32 %v351, %v492
      %v494 = vpop.f32.mrb[0].mxu0
      %495 = vmatprep.mubr.f32.mxu0 0.0
      %496 = vmatmul.mubr.f32.gmra.mrb[0].mxu0 %v372
      %v497 = vpop.f32.mrb[0].mxu0
      %v498 = vadd.f32 %v351, %v497
      %v499 = vpop.f32.mrb[0].mxu0
      %500 = vmatprep.mubr.f32.mxu0 0.0
      %501 = vmatmul.mubr.f32.gmra.mrb[0].mxu0 %v375
      %v502 = vpop.f32.mrb[0].mxu0
      %v503 = vadd.f32 %v351, %v502
      %v504 = vpop.f32.mrb[0].mxu0
      %505 = vmatprep.mubr.f32.mxu0 0.0
      %506 = vmatmul.mubr.f32.gmra.mrb[0].mxu0 %v378
      %v507 = vpop.f32.mrb[0].mxu0
      %v508 = vadd.f32 %v351, %v507
      %v509 = vpop.f32.mrb[0].mxu0
      %510 = vmatprep.mubr.f32.mxu0 0.0
      %511 = vmatmul.mubr.f32.gmra.mrb[0].mxu0 %v381
      %v512 = vpop.f32.mrb[0].mxu0
      %v513 = vadd.f32 %v351, %v512
      %v514 = vpop.f32.mrb[0].mxu0
      %515 = vmatprep.mubr.f32.mxu0 0.0
      %516 = vmatmul.mubr.f32.gmra.mrb[0].mxu0 %v384
      %v517 = vpop.f32.mrb[0].mxu0
      %v518 = vadd.f32 %v351, %v517
      %v519 = vpop.f32.mrb[0].mxu0
      %520 = vmatprep.mubr.f32.mxu0 0.0
      %521 = vmatmul.mubr.f32.gmra.mrb[0].mxu0 %v387
      %v522 = vpop.f32.mrb[0].mxu0
      %v523 = vadd.f32 %v351, %v522
      %v524 = vpop.f32.mrb[0].mxu0
      %525 = vmatprep.mubr.f32.mxu0 0.0
      %526 = vmatmul.mubr.f32.gmra.mrb[0].mxu0 %v390
      %v527 = vpop.f32.mrb[0].mxu0
      %v528 = vadd.f32 %v351, %v527
      %v529 = vpop.f32.mrb[0].mxu0
      %530 = vmatprep.mubr.f32.mxu0 0.0
      %531 = vmatmul.mubr.f32.gmra.mrb[0].mxu0 %v393
      %v532 = vpop.f32.mrb[0].mxu0
      %v533 = vadd.f32 %v351, %v532
      %v534 = vpop.f32.mrb[0].mxu0
      %535 = vmatprep.mubr.f32.mxu0 0.0
      %536 = vmatmul.mubr.f32.gmra.mrb[0].mxu0 %v396
      %v537 = vpop.f32.mrb[0].mxu0
      %v538 = vadd.f32 %v351, %v537
      %v539 = vpop.f32.mrb[0].mxu0
      %540 = vmatprep.mubr.f32.mxu0 0.0
      %541 = vmatmul.mubr.f32.gmra.mrb[0].mxu0 %v399
      %v542 = vpop.f32.mrb[0].mxu0
      %v543 = vadd.f32 %v351, %v542
      %v544 = vpop.f32.mrb[0].mxu0
      %545 = vdwg.mxu0
      %vm546 = vcmask 261120
      %v547 = vsel %vm546, %v468, 0.0
      %548 = vadd.xlane.f32.xlu0 %v547
      %v549 = vpop.xlane.xlu0 %548
      %v550 = vsel %vm546, %v473, 0.0
      %551 = vadd.xlane.f32.xlu0 %v550
      %v552 = vpop.xlane.xlu0 %551
      %v553 = vsel %vm546, %v478, 0.0
      %554 = vadd.xlane.f32.xlu0 %v553
      %v555 = vpop.xlane.xlu0 %554
      %v556 = vsel %vm546, %v483, 0.0
      %557 = vadd.xlane.f32.xlu0 %v556
      %v558 = vpop.xlane.xlu0 %557
      %v559 = vsel %vm546, %v488, 0.0
      %560 = vadd.xlane.f32.xlu0 %v559
      %v561 = vpop.xlane.xlu0 %560
      %v562 = vsel %vm546, %v493, 0.0
      %563 = vadd.xlane.f32.xlu0 %v562
      %v564 = vpop.xlane.xlu0 %563
      %v565 = vsel %vm546, %v498, 0.0
      %566 = vadd.xlane.f32.xlu0 %v565
      %v567 = vpop.xlane.xlu0 %566
      %v568 = vsel %vm546, %v503, 0.0
      %569 = vadd.xlane.f32.xlu0 %v568
      %v570 = vpop.xlane.xlu0 %569
      %v571 = vsel %vm546, %v508, 0.0
      %572 = vadd.xlane.f32.xlu0 %v571
      %v573 = vpop.xlane.xlu0 %572
      %v574 = vsel %vm546, %v513, 0.0
      %575 = vadd.xlane.f32.xlu0 %v574
      %v576 = vpop.xlane.xlu0 %575
      %v577 = vsel %vm546, %v518, 0.0
      %578 = vadd.xlane.f32.xlu0 %v577
      %v579 = vpop.xlane.xlu0 %578
      %v580 = vsel %vm546, %v523, 0.0
      %581 = vadd.xlane.f32.xlu0 %v580
      %v582 = vpop.xlane.xlu0 %581
      %v583 = vsel %vm546, %v528, 0.0
      %584 = vadd.xlane.f32.xlu0 %v583
      %v585 = vpop.xlane.xlu0 %584
      %v586 = vsel %vm546, %v533, 0.0
      %587 = vadd.xlane.f32.xlu0 %v586
      %v588 = vpop.xlane.xlu0 %587
      %v589 = vsel %vm546, %v538, 0.0
      %590 = vadd.xlane.f32.xlu0 %v589
      %v591 = vpop.xlane.xlu0 %590
      %v592 = vsel %vm546, %v543, 0.0
      %593 = vadd.xlane.f32.xlu0 %v592
      %v594 = vpop.xlane.xlu0 %593
      %v595 = vrcp.pop 32.0
      %v596 = vmul.f32 %v549, %v595
      %v597 = vmul.f32 %v552, %v595
      %v598 = vmul.f32 %v555, %v595
      %v599 = vmul.f32 %v558, %v595
      %v600 = vmul.f32 %v561, %v595
      %v601 = vmul.f32 %v564, %v595
      %v602 = vmul.f32 %v567, %v595
      %v603 = vmul.f32 %v570, %v595
      %v604 = vmul.f32 %v573, %v595
      %v605 = vmul.f32 %v576, %v595
      %v606 = vmul.f32 %v579, %v595
      %v607 = vmul.f32 %v582, %v595
      %v608 = vmul.f32 %v585, %v595
      %v609 = vmul.f32 %v588, %v595
      %v610 = vmul.f32 %v591, %v595
      %v611 = vmul.f32 %v594, %v595
      %v612 = vsub.f32 %v468, %v596
      %v613 = vsub.f32 %v473, %v597
      %v614 = vsub.f32 %v478, %v598
      %v615 = vsub.f32 %v483, %v599
      %v616 = vsub.f32 %v488, %v600
      %v617 = vsub.f32 %v493, %v601
      %v618 = vsub.f32 %v498, %v602
      %v619 = vsub.f32 %v503, %v603
      %v620 = vsub.f32 %v508, %v604
      %v621 = vsub.f32 %v513, %v605
      %v622 = vsub.f32 %v518, %v606
      %v623 = vsub.f32 %v523, %v607
      %v624 = vsub.f32 %v528, %v608
      %v625 = vsub.f32 %v533, %v609
      %v626 = vsub.f32 %v538, %v610
      %v627 = vsub.f32 %v543, %v611
      %v628 = vmul.f32 %v612, %v612
      %v629 = vmul.f32 %v613, %v613
      %v630 = vmul.f32 %v614, %v614
      %v631 = vmul.f32 %v615, %v615
      %v632 = vmul.f32 %v616, %v616
      %v633 = vmul.f32 %v617, %v617
      %v634 = vmul.f32 %v618, %v618
      %v635 = vmul.f32 %v619, %v619
      %v636 = vmul.f32 %v620, %v620
      %v637 = vmul.f32 %v621, %v621
      %v638 = vmul.f32 %v622, %v622
      %v639 = vmul.f32 %v623, %v623
      %v640 = vmul.f32 %v624, %v624
      %v641 = vmul.f32 %v625, %v625
      %v642 = vmul.f32 %v626, %v626
      %v643 = vmul.f32 %v627, %v627
      %v644 = vsel %vm546, %v628, 0.0
      %645 = vadd.xlane.f32.xlu0 %v644
      %v646 = vpop.xlane.xlu0 %645
      %v647 = vsel %vm546, %v629, 0.0
      %648 = vadd.xlane.f32.xlu0 %v647
      %v649 = vpop.xlane.xlu0 %648
      %v650 = vsel %vm546, %v630, 0.0
      %651 = vadd.xlane.f32.xlu0 %v650
      %v652 = vpop.xlane.xlu0 %651
      %v653 = vsel %vm546, %v631, 0.0
      %654 = vadd.xlane.f32.xlu0 %v653
      %v655 = vpop.xlane.xlu0 %654
      %v656 = vsel %vm546, %v632, 0.0
      %657 = vadd.xlane.f32.xlu0 %v656
      %v658 = vpop.xlane.xlu0 %657
      %v659 = vsel %vm546, %v633, 0.0
      %660 = vadd.xlane.f32.xlu0 %v659
      %v661 = vpop.xlane.xlu0 %660
      %v662 = vsel %vm546, %v634, 0.0
      %663 = vadd.xlane.f32.xlu0 %v662
      %v664 = vpop.xlane.xlu0 %663
      %v665 = vsel %vm546, %v635, 0.0
      %666 = vadd.xlane.f32.xlu0 %v665
      %v667 = vpop.xlane.xlu0 %666
      %v668 = vsel %vm546, %v636, 0.0
      %669 = vadd.xlane.f32.xlu0 %v668
      %v670 = vpop.xlane.xlu0 %669
      %v671 = vsel %vm546, %v637, 0.0
      %672 = vadd.xlane.f32.xlu0 %v671
      %v673 = vpop.xlane.xlu0 %672
      %v674 = vsel %vm546, %v638, 0.0
      %675 = vadd.xlane.f32.xlu0 %v674
      %v676 = vpop.xlane.xlu0 %675
      %v677 = vsel %vm546, %v639, 0.0
      %678 = vadd.xlane.f32.xlu0 %v677
      %v679 = vpop.xlane.xlu0 %678
      %v680 = vsel %vm546, %v640, 0.0
      %681 = vadd.xlane.f32.xlu0 %v680
      %v682 = vpop.xlane.xlu0 %681
      %v683 = vsel %vm546, %v641, 0.0
      %684 = vadd.xlane.f32.xlu0 %v683
      %v685 = vpop.xlane.xlu0 %684
      %v686 = vsel %vm546, %v642, 0.0
      %687 = vadd.xlane.f32.xlu0 %v686
      %v688 = vpop.xlane.xlu0 %687
      %v689 = vsel %vm546, %v643, 0.0
      %690 = vadd.xlane.f32.xlu0 %v689
      %v691 = vpop.xlane.xlu0 %690
      %v692 = vmul.f32 %v646, %v595
      %v693 = vmul.f32 %v649, %v595
      %v694 = vmul.f32 %v652, %v595
      %v695 = vmul.f32 %v655, %v595
      %v696 = vmul.f32 %v658, %v595
      %v697 = vmul.f32 %v661, %v595
      %v698 = vmul.f32 %v664, %v595
      %v699 = vmul.f32 %v667, %v595
      %v700 = vmul.f32 %v670, %v595
      %v701 = vmul.f32 %v673, %v595
      %v702 = vmul.f32 %v676, %v595
      %v703 = vmul.f32 %v679, %v595
      %v704 = vmul.f32 %v682, %v595
      %v705 = vmul.f32 %v685, %v595
      %v706 = vmul.f32 %v688, %v595
      %v707 = vmul.f32 %v691, %v595
      %v708 = vadd.f32 %v692, 1e-05
      %v709 = vadd.f32 %v693, 1e-05
      %v710 = vadd.f32 %v694, 1e-05
      %v711 = vadd.f32 %v695, 1e-05
      %v712 = vadd.f32 %v696, 1e-05
      %v713 = vadd.f32 %v697, 1e-05
      %v714 = vadd.f32 %v698, 1e-05
      %v715 = vadd.f32 %v699, 1e-05
      %v716 = vadd.f32 %v700, 1e-05
      %v717 = vadd.f32 %v701, 1e-05
      %v718 = vadd.f32 %v702, 1e-05
      %v719 = vadd.f32 %v703, 1e-05
      %v720 = vadd.f32 %v704, 1e-05
      %v721 = vadd.f32 %v705, 1e-05
      %v722 = vadd.f32 %v706, 1e-05
      %v723 = vadd.f32 %v707, 1e-05
      %v724 = vrsqrt.pop %v708
      %v725 = vrsqrt.pop %v709
      %v726 = vrsqrt.pop %v710
      %v727 = vrsqrt.pop %v711
      %v728 = vrsqrt.pop %v712
      %v729 = vrsqrt.pop %v713
      %v730 = vrsqrt.pop %v714
      %v731 = vrsqrt.pop %v715
      %v732 = vrsqrt.pop %v716
      %v733 = vrsqrt.pop %v717
      %v734 = vrsqrt.pop %v718
      %v735 = vrsqrt.pop %v719
      %v736 = vrsqrt.pop %v720
      %v737 = vrsqrt.pop %v721
      %v738 = vrsqrt.pop %v722
      %v739 = vrsqrt.pop %v723
      %v740 = vmul.f32 %v612, %v724
      %v741 = vmul.f32 %v613, %v725
      %v742 = vmul.f32 %v614, %v726
      %v743 = vmul.f32 %v615, %v727
      %v744 = vmul.f32 %v616, %v728
      %v745 = vmul.f32 %v617, %v729
      %v746 = vmul.f32 %v618, %v730
      %v747 = vmul.f32 %v619, %v731
      %v748 = vmul.f32 %v620, %v732
      %v749 = vmul.f32 %v621, %v733
      %v750 = vmul.f32 %v622, %v734
      %v751 = vmul.f32 %v623, %v735
      %v752 = vmul.f32 %v624, %v736
      %v753 = vmul.f32 %v625, %v737
      %v754 = vmul.f32 %v626, %v738
      %v755 = vmul.f32 %v627, %v739
      %v756 = vlaneseq
      %v757 = vshrl.u32 %v756, 7
      %v758 = vsub.s32 0, %v757
      %v759 = vrot.slane %v324, %v758
      %v760 = vmul.f32 %v740, %v759
      %v761 = vmul.f32 %v741, %v759
      %v762 = vmul.f32 %v742, %v759
      %v763 = vmul.f32 %v743, %v759
      %v764 = vmul.f32 %v744, %v759
      %v765 = vmul.f32 %v745, %v759
      %v766 = vmul.f32 %v746, %v759
      %v767 = vmul.f32 %v747, %v759
      %v768 = vmul.f32 %v748, %v759
      %v769 = vmul.f32 %v749, %v759
      %v770 = vmul.f32 %v750, %v759
      %v771 = vmul.f32 %v751, %v759
      %v772 = vmul.f32 %v752, %v759
      %v773 = vmul.f32 %v753, %v759
      %v774 = vmul.f32 %v754, %v759
      %v775 = vmul.f32 %v755, %v759
      %v776 = vlaneseq
      %v777 = vshrl.u32 %v776, 7
      %v778 = vsub.s32 0, %v777
      %v779 = vrot.slane %v325, %v778
      %v780 = vadd.f32 %v760, %v779
      %v781 = vadd.f32 %v761, %v779
      %v782 = vadd.f32 %v762, %v779
      %v783 = vadd.f32 %v763, %v779
      %v784 = vadd.f32 %v764, %v779
      %v785 = vadd.f32 %v765, %v779
      %v786 = vadd.f32 %v766, %v779
      %v787 = vadd.f32 %v767, %v779
      %v788 = vadd.f32 %v768, %v779
      %v789 = vadd.f32 %v769, %v779
      %v790 = vadd.f32 %v770, %v779
      %v791 = vadd.f32 %v771, %v779
      %v792 = vadd.f32 %v772, %v779
      %v793 = vadd.f32 %v773, %v779
      %v794 = vadd.f32 %v774, %v779
      %v795 = vadd.f32 %v775, %v779
      %v796 = vmax.f32 %v780, 0.0
      %v797 = vmax.f32 %v781, 0.0
      %v798 = vmax.f32 %v782, 0.0
      %v799 = vmax.f32 %v783, 0.0
      %v800 = vmax.f32 %v784, 0.0
      %v801 = vmax.f32 %v785, 0.0
      %v802 = vmax.f32 %v786, 0.0
      %v803 = vmax.f32 %v787, 0.0
      %v804 = vmax.f32 %v788, 0.0
      %v805 = vmax.f32 %v789, 0.0
      %v806 = vmax.f32 %v790, 0.0
      %v807 = vmax.f32 %v791, 0.0
      %v808 = vmax.f32 %v792, 0.0
      %v809 = vmax.f32 %v793, 0.0
      %v810 = vmax.f32 %v794, 0.0
      %v811 = vmax.f32 %v795, 0.0
      %v812 = vld [vmem:[%s2] sm:$0xff]
      %v813 = vld [vmem:[%s2 + $0x8] sm:$0xff]
      %v814 = vld [vmem:[%s2 + $0x10] sm:$0xff]
      %v815 = vld [vmem:[%s2 + $0x18] sm:$0xff]
      %v816 = vlaneseq
      %v817 = vshrl.u32 %v816, 7
      %v818 = vsub.s32 0, %v817
      %v819 = vrot.slane %v326, %v818
      %v821 = vsel %vm546, %v796, 0
      %v824 = vsel %vm546, %v797, 0
      %v827 = vsel %vm546, %v798, 0
      %v830 = vsel %vm546, %v799, 0
      %v833 = vsel %vm546, %v800, 0
      %v836 = vsel %vm546, %v801, 0
      %v839 = vsel %vm546, %v802, 0
      %v842 = vsel %vm546, %v803, 0
      %v845 = vsel %vm546, %v804, 0
      %v848 = vsel %vm546, %v805, 0
      %v851 = vsel %vm546, %v806, 0
      %v854 = vsel %vm546, %v807, 0
      %v857 = vsel %vm546, %v808, 0
      %v860 = vsel %vm546, %v809, 0
      %v863 = vsel %vm546, %v810, 0
      %v866 = vsel %vm546, %v811, 0
      %868 = vmatprep.subr.mxu0 0.0
      %869 = vmatpush1.msra.mxu0 %v812
      %870 = vmatprep.subr.mxu0 0.0
      %871 = vmatpush1.msra.mxu0 %v813
      %872 = vmatprep.subr.mxu0 0.0
      %873 = vmatpush1.msra.mxu0 %v814
      %874 = vmatprep.subr.mxu0 0.0
      %875 = vmatpush1.msra.mxu0 %v815
      %876 = vmatprep.subr.mxu0 0.0
      %877 = vmatpush1.msra.mxu0 0.0
      %878 = vmatprep.subr.mxu0 0.0
      %879 = vmatpush1.msra.mxu0 0.0
      %880 = vmatprep.subr.mxu0 0.0
      %881 = vmatpush1.msra.mxu0 0.0
      %882 = vmatprep.subr.mxu0 0.0
      %883 = vmatpush1.msra.mxu0 0.0
      %884 = vmatprep.subr.mxu0 0.0
      %885 = vmatpush1.msra.mxu0 0.0
      %886 = vmatprep.subr.mxu0 0.0
      %887 = vmatpush1.msra.mxu0 0.0
      %888 = vmatprep.subr.mxu0 0.0
      %889 = vmatpush1.msra.mxu0 0.0
      %890 = vmatprep.subr.mxu0 0.0
      %891 = vmatpush1.msra.mxu0 0.0
      %892 = vmatprep.subr.mxu0 0.0
      %893 = vmatpush1.msra.mxu0 0.0
      %894 = vmatprep.subr.mxu0 0.0
      %895 = vmatpush1.msra.mxu0 0.0
      %896 = vmatprep.subr.mxu0 0.0
      %897 = vmatpush1.msra.mxu0 0.0
      %898 = vmatprep.subr.mxu0 0.0
      %899 = vmatpush1.msra.mxu0 0.0
      %900 = vmatprep.subr.mxu0 0.0
      %901 = vmatpush1.msra.mxu0 0.0
      %902 = vmatprep.subr.mxu0 0.0
      %903 = vmatpush1.msra.mxu0 0.0
      %904 = vmatprep.subr.mxu0 0.0
      %905 = vmatpush1.msra.mxu0 0.0
      %906 = vmatprep.subr.mxu0 0.0
      %907 = vmatpush1.msra.mxu0 0.0
      %908 = vmatprep.subr.mxu0 0.0
      %909 = vmatpush1.msra.mxu0 0.0
      %910 = vmatprep.subr.mxu0 0.0
      %911 = vmatpush1.msra.mxu0 0.0
      %912 = vmatprep.subr.mxu0 0.0
      %913 = vmatpush1.msra.mxu0 0.0
      %914 = vmatprep.subr.mxu0 0.0
      %915 = vmatpush1.msra.mxu0 0.0
      %916 = vmatprep.subr.mxu0 0.0
      %917 = vmatpush1.msra.mxu0 0.0
      %918 = vmatprep.subr.mxu0 0.0
      %919 = vmatpush1.msra.mxu0 0.0
      %920 = vmatprep.subr.mxu0 0.0
      %921 = vmatpush1.msra.mxu0 0.0
      %922 = vmatprep.subr.mxu0 0.0
      %923 = vmatpush1.msra.mxu0 0.0
      %924 = vmatprep.subr.mxu0 0.0
      %925 = vmatpush1.msra.mxu0 0.0
      %926 = vmatprep.subr.mxu0 0.0
      %927 = vmatpush1.msra.mxu0 0.0
      %928 = vmatprep.subr.mxu0 0.0
      %929 = vmatpush1.msra.mxu0 0.0
      %930 = vmatprep.subr.mxu0 0.0
      %931 = vmatpush1.msra.mxu0 0.0
      %932 = vmatprep.mubr.f32.mxu0 0.0
      %933 = vmatmul.mubr.f32.gmra.mrb[0].mxu0 %v821
      %v934 = vpop.f32.mrb[0].mxu0
      %v935 = vadd.f32 %v819, %v934
      %v936 = vpop.f32.mrb[0].mxu0
      %937 = vmatprep.mubr.f32.mxu0 0.0
      %938 = vmatmul.mubr.f32.gmra.mrb[0].mxu0 %v824
      %v939 = vpop.f32.mrb[0].mxu0
      %v940 = vadd.f32 %v819, %v939
      %v941 = vpop.f32.mrb[0].mxu0
      %942 = vmatprep.mubr.f32.mxu0 0.0
      %943 = vmatmul.mubr.f32.gmra.mrb[0].mxu0 %v827
      %v944 = vpop.f32.mrb[0].mxu0
      %v945 = vadd.f32 %v819, %v944
      %v946 = vpop.f32.mrb[0].mxu0
      %947 = vmatprep.mubr.f32.mxu0 0.0
      %948 = vmatmul.mubr.f32.gmra.mrb[0].mxu0 %v830
      %v949 = vpop.f32.mrb[0].mxu0
      %v950 = vadd.f32 %v819, %v949
      %v951 = vpop.f32.mrb[0].mxu0
      %952 = vmatprep.mubr.f32.mxu0 0.0
      %953 = vmatmul.mubr.f32.gmra.mrb[0].mxu0 %v833
      %v954 = vpop.f32.mrb[0].mxu0
      %v955 = vadd.f32 %v819, %v954
      %v956 = vpop.f32.mrb[0].mxu0
      %957 = vmatprep.mubr.f32.mxu0 0.0
      %958 = vmatmul.mubr.f32.gmra.mrb[0].mxu0 %v836
      %v959 = vpop.f32.mrb[0].mxu0
      %v960 = vadd.f32 %v819, %v959
      %v961 = vpop.f32.mrb[0].mxu0
      %962 = vmatprep.mubr.f32.mxu0 0.0
      %963 = vmatmul.mubr.f32.gmra.mrb[0].mxu0 %v839
      %v964 = vpop.f32.mrb[0].mxu0
      %v965 = vadd.f32 %v819, %v964
      %v966 = vpop.f32.mrb[0].mxu0
      %967 = vmatprep.mubr.f32.mxu0 0.0
      %968 = vmatmul.mubr.f32.gmra.mrb[0].mxu0 %v842
      %v969 = vpop.f32.mrb[0].mxu0
      %v970 = vadd.f32 %v819, %v969
      %v971 = vpop.f32.mrb[0].mxu0
      %972 = vmatprep.mubr.f32.mxu0 0.0
      %973 = vmatmul.mubr.f32.gmra.mrb[0].mxu0 %v845
      %v974 = vpop.f32.mrb[0].mxu0
      %v975 = vadd.f32 %v819, %v974
      %v976 = vpop.f32.mrb[0].mxu0
      %977 = vmatprep.mubr.f32.mxu0 0.0
      %978 = vmatmul.mubr.f32.gmra.mrb[0].mxu0 %v848
      %v979 = vpop.f32.mrb[0].mxu0
      %v980 = vadd.f32 %v819, %v979
      %v981 = vpop.f32.mrb[0].mxu0
      %982 = vmatprep.mubr.f32.mxu0 0.0
      %983 = vmatmul.mubr.f32.gmra.mrb[0].mxu0 %v851
      %v984 = vpop.f32.mrb[0].mxu0
      %v985 = vadd.f32 %v819, %v984
      %v986 = vpop.f32.mrb[0].mxu0
      %987 = vmatprep.mubr.f32.mxu0 0.0
      %988 = vmatmul.mubr.f32.gmra.mrb[0].mxu0 %v854
      %v989 = vpop.f32.mrb[0].mxu0
      %v990 = vadd.f32 %v819, %v989
      %v991 = vpop.f32.mrb[0].mxu0
      %992 = vmatprep.mubr.f32.mxu0 0.0
      %993 = vmatmul.mubr.f32.gmra.mrb[0].mxu0 %v857
      %v994 = vpop.f32.mrb[0].mxu0
      %v995 = vadd.f32 %v819, %v994
      %v996 = vpop.f32.mrb[0].mxu0
      %997 = vmatprep.mubr.f32.mxu0 0.0
      %998 = vmatmul.mubr.f32.gmra.mrb[0].mxu0 %v860
      %v999 = vpop.f32.mrb[0].mxu0
      %v1000 = vadd.f32 %v819, %v999
      %v1001 = vpop.f32.mrb[0].mxu0
      %1002 = vmatprep.mubr.f32.mxu0 0.0
      %1003 = vmatmul.mubr.f32.gmra.mrb[0].mxu0 %v863
      %v1004 = vpop.f32.mrb[0].mxu0
      %v1005 = vadd.f32 %v819, %v1004
      %v1006 = vpop.f32.mrb[0].mxu0
      %1007 = vmatprep.mubr.f32.mxu0 0.0
      %1008 = vmatmul.mubr.f32.gmra.mrb[0].mxu0 %v866
      %v1009 = vpop.f32.mrb[0].mxu0
      %v1010 = vadd.f32 %v819, %v1009
      %v1011 = vpop.f32.mrb[0].mxu0
      %1012 = vdwg.mxu0
      %v1013 = vsel %vm546, %v935, 0.0
      %1014 = vadd.xlane.f32.xlu0 %v1013
      %v1015 = vpop.xlane.xlu0 %1014
      %v1016 = vsel %vm546, %v940, 0.0
      %1017 = vadd.xlane.f32.xlu0 %v1016
      %v1018 = vpop.xlane.xlu0 %1017
      %v1019 = vsel %vm546, %v945, 0.0
      %1020 = vadd.xlane.f32.xlu0 %v1019
      %v1021 = vpop.xlane.xlu0 %1020
      %v1022 = vsel %vm546, %v950, 0.0
      %1023 = vadd.xlane.f32.xlu0 %v1022
      %v1024 = vpop.xlane.xlu0 %1023
      %v1025 = vsel %vm546, %v955, 0.0
      %1026 = vadd.xlane.f32.xlu0 %v1025
      %v1027 = vpop.xlane.xlu0 %1026
      %v1028 = vsel %vm546, %v960, 0.0
      %1029 = vadd.xlane.f32.xlu0 %v1028
      %v1030 = vpop.xlane.xlu0 %1029
      %v1031 = vsel %vm546, %v965, 0.0
      %1032 = vadd.xlane.f32.xlu0 %v1031
      %v1033 = vpop.xlane.xlu0 %1032
      %v1034 = vsel %vm546, %v970, 0.0
      %1035 = vadd.xlane.f32.xlu0 %v1034
      %v1036 = vpop.xlane.xlu0 %1035
      %v1037 = vsel %vm546, %v975, 0.0
      %1038 = vadd.xlane.f32.xlu0 %v1037
      %v1039 = vpop.xlane.xlu0 %1038
      %v1040 = vsel %vm546, %v980, 0.0
      %1041 = vadd.xlane.f32.xlu0 %v1040
      %v1042 = vpop.xlane.xlu0 %1041
      %v1043 = vsel %vm546, %v985, 0.0
      %1044 = vadd.xlane.f32.xlu0 %v1043
      %v1045 = vpop.xlane.xlu0 %1044
      %v1046 = vsel %vm546, %v990, 0.0
      %1047 = vadd.xlane.f32.xlu0 %v1046
      %v1048 = vpop.xlane.xlu0 %1047
      %v1049 = vsel %vm546, %v995, 0.0
      %1050 = vadd.xlane.f32.xlu0 %v1049
      %v1051 = vpop.xlane.xlu0 %1050
      %v1052 = vsel %vm546, %v1000, 0.0
      %1053 = vadd.xlane.f32.xlu0 %v1052
      %v1054 = vpop.xlane.xlu0 %1053
      %v1055 = vsel %vm546, %v1005, 0.0
      %1056 = vadd.xlane.f32.xlu0 %v1055
      %v1057 = vpop.xlane.xlu0 %1056
      %v1058 = vsel %vm546, %v1010, 0.0
      %1059 = vadd.xlane.f32.xlu0 %v1058
      %v1060 = vpop.xlane.xlu0 %1059
      %v1061 = vmul.f32 %v1015, %v595
      %v1062 = vmul.f32 %v1018, %v595
      %v1063 = vmul.f32 %v1021, %v595
      %v1064 = vmul.f32 %v1024, %v595
      %v1065 = vmul.f32 %v1027, %v595
      %v1066 = vmul.f32 %v1030, %v595
      %v1067 = vmul.f32 %v1033, %v595
      %v1068 = vmul.f32 %v1036, %v595
      %v1069 = vmul.f32 %v1039, %v595
      %v1070 = vmul.f32 %v1042, %v595
      %v1071 = vmul.f32 %v1045, %v595
      %v1072 = vmul.f32 %v1048, %v595
      %v1073 = vmul.f32 %v1051, %v595
      %v1074 = vmul.f32 %v1054, %v595
      %v1075 = vmul.f32 %v1057, %v595
      %v1076 = vmul.f32 %v1060, %v595
      %v1077 = vsub.f32 %v935, %v1061
      %v1078 = vsub.f32 %v940, %v1062
      %v1079 = vsub.f32 %v945, %v1063
      %v1080 = vsub.f32 %v950, %v1064
      %v1081 = vsub.f32 %v955, %v1065
      %v1082 = vsub.f32 %v960, %v1066
      %v1083 = vsub.f32 %v965, %v1067
      %v1084 = vsub.f32 %v970, %v1068
      %v1085 = vsub.f32 %v975, %v1069
      %v1086 = vsub.f32 %v980, %v1070
      %v1087 = vsub.f32 %v985, %v1071
      %v1088 = vsub.f32 %v990, %v1072
      %v1089 = vsub.f32 %v995, %v1073
      %v1090 = vsub.f32 %v1000, %v1074
      %v1091 = vsub.f32 %v1005, %v1075
      %v1092 = vsub.f32 %v1010, %v1076
      %v1093 = vmul.f32 %v1077, %v1077
      %v1094 = vmul.f32 %v1078, %v1078
      %v1095 = vmul.f32 %v1079, %v1079
      %v1096 = vmul.f32 %v1080, %v1080
      %v1097 = vmul.f32 %v1081, %v1081
      %v1098 = vmul.f32 %v1082, %v1082
      %v1099 = vmul.f32 %v1083, %v1083
      %v1100 = vmul.f32 %v1084, %v1084
      %v1101 = vmul.f32 %v1085, %v1085
      %v1102 = vmul.f32 %v1086, %v1086
      %v1103 = vmul.f32 %v1087, %v1087
      %v1104 = vmul.f32 %v1088, %v1088
      %v1105 = vmul.f32 %v1089, %v1089
      %v1106 = vmul.f32 %v1090, %v1090
      %v1107 = vmul.f32 %v1091, %v1091
      %v1108 = vmul.f32 %v1092, %v1092
      %v1109 = vsel %vm546, %v1093, 0.0
      %1110 = vadd.xlane.f32.xlu0 %v1109
      %v1111 = vpop.xlane.xlu0 %1110
      %v1112 = vsel %vm546, %v1094, 0.0
      %1113 = vadd.xlane.f32.xlu0 %v1112
      %v1114 = vpop.xlane.xlu0 %1113
      %v1115 = vsel %vm546, %v1095, 0.0
      %1116 = vadd.xlane.f32.xlu0 %v1115
      %v1117 = vpop.xlane.xlu0 %1116
      %v1118 = vsel %vm546, %v1096, 0.0
      %1119 = vadd.xlane.f32.xlu0 %v1118
      %v1120 = vpop.xlane.xlu0 %1119
      %v1121 = vsel %vm546, %v1097, 0.0
      %1122 = vadd.xlane.f32.xlu0 %v1121
      %v1123 = vpop.xlane.xlu0 %1122
      %v1124 = vsel %vm546, %v1098, 0.0
      %1125 = vadd.xlane.f32.xlu0 %v1124
      %v1126 = vpop.xlane.xlu0 %1125
      %v1127 = vsel %vm546, %v1099, 0.0
      %1128 = vadd.xlane.f32.xlu0 %v1127
      %v1129 = vpop.xlane.xlu0 %1128
      %v1130 = vsel %vm546, %v1100, 0.0
      %1131 = vadd.xlane.f32.xlu0 %v1130
      %v1132 = vpop.xlane.xlu0 %1131
      %v1133 = vsel %vm546, %v1101, 0.0
      %1134 = vadd.xlane.f32.xlu0 %v1133
      %v1135 = vpop.xlane.xlu0 %1134
      %v1136 = vsel %vm546, %v1102, 0.0
      %1137 = vadd.xlane.f32.xlu0 %v1136
      %v1138 = vpop.xlane.xlu0 %1137
      %v1139 = vsel %vm546, %v1103, 0.0
      %1140 = vadd.xlane.f32.xlu0 %v1139
      %v1141 = vpop.xlane.xlu0 %1140
      %v1142 = vsel %vm546, %v1104, 0.0
      %1143 = vadd.xlane.f32.xlu0 %v1142
      %v1144 = vpop.xlane.xlu0 %1143
      %v1145 = vsel %vm546, %v1105, 0.0
      %1146 = vadd.xlane.f32.xlu0 %v1145
      %v1147 = vpop.xlane.xlu0 %1146
      %v1148 = vsel %vm546, %v1106, 0.0
      %1149 = vadd.xlane.f32.xlu0 %v1148
      %v1150 = vpop.xlane.xlu0 %1149
      %v1151 = vsel %vm546, %v1107, 0.0
      %1152 = vadd.xlane.f32.xlu0 %v1151
      %v1153 = vpop.xlane.xlu0 %1152
      %v1154 = vsel %vm546, %v1108, 0.0
      %1155 = vadd.xlane.f32.xlu0 %v1154
      %v1156 = vpop.xlane.xlu0 %1155
      %v1157 = vmul.f32 %v1111, %v595
      %v1158 = vmul.f32 %v1114, %v595
      %v1159 = vmul.f32 %v1117, %v595
      %v1160 = vmul.f32 %v1120, %v595
      %v1161 = vmul.f32 %v1123, %v595
      %v1162 = vmul.f32 %v1126, %v595
      %v1163 = vmul.f32 %v1129, %v595
      %v1164 = vmul.f32 %v1132, %v595
      %v1165 = vmul.f32 %v1135, %v595
      %v1166 = vmul.f32 %v1138, %v595
      %v1167 = vmul.f32 %v1141, %v595
      %v1168 = vmul.f32 %v1144, %v595
      %v1169 = vmul.f32 %v1147, %v595
      %v1170 = vmul.f32 %v1150, %v595
      %v1171 = vmul.f32 %v1153, %v595
      %v1172 = vmul.f32 %v1156, %v595
      %v1173 = vadd.f32 %v1157, 1e-05
      %v1174 = vadd.f32 %v1158, 1e-05
      %v1175 = vadd.f32 %v1159, 1e-05
      %v1176 = vadd.f32 %v1160, 1e-05
      %v1177 = vadd.f32 %v1161, 1e-05
      %v1178 = vadd.f32 %v1162, 1e-05
      %v1179 = vadd.f32 %v1163, 1e-05
      %v1180 = vadd.f32 %v1164, 1e-05
      %v1181 = vadd.f32 %v1165, 1e-05
      %v1182 = vadd.f32 %v1166, 1e-05
      %v1183 = vadd.f32 %v1167, 1e-05
      %v1184 = vadd.f32 %v1168, 1e-05
      %v1185 = vadd.f32 %v1169, 1e-05
      %v1186 = vadd.f32 %v1170, 1e-05
      %v1187 = vadd.f32 %v1171, 1e-05
      %v1188 = vadd.f32 %v1172, 1e-05
      %v1189 = vrsqrt.pop %v1173
      %v1190 = vrsqrt.pop %v1174
      %v1191 = vrsqrt.pop %v1175
      %v1192 = vrsqrt.pop %v1176
      %v1193 = vrsqrt.pop %v1177
      %v1194 = vrsqrt.pop %v1178
      %v1195 = vrsqrt.pop %v1179
      %v1196 = vrsqrt.pop %v1180
      %v1197 = vrsqrt.pop %v1181
      %v1198 = vrsqrt.pop %v1182
      %v1199 = vrsqrt.pop %v1183
      %v1200 = vrsqrt.pop %v1184
      %v1201 = vrsqrt.pop %v1185
      %v1202 = vrsqrt.pop %v1186
      %v1203 = vrsqrt.pop %v1187
      %v1204 = vrsqrt.pop %v1188
      %v1205 = vmul.f32 %v1077, %v1189
      %v1206 = vmul.f32 %v1078, %v1190
      %v1207 = vmul.f32 %v1079, %v1191
      %v1208 = vmul.f32 %v1080, %v1192
      %v1209 = vmul.f32 %v1081, %v1193
      %v1210 = vmul.f32 %v1082, %v1194
      %v1211 = vmul.f32 %v1083, %v1195
      %v1212 = vmul.f32 %v1084, %v1196
      %v1213 = vmul.f32 %v1085, %v1197
      %v1214 = vmul.f32 %v1086, %v1198
      %v1215 = vmul.f32 %v1087, %v1199
      %v1216 = vmul.f32 %v1088, %v1200
      %v1217 = vmul.f32 %v1089, %v1201
      %v1218 = vmul.f32 %v1090, %v1202
      %v1219 = vmul.f32 %v1091, %v1203
      %v1220 = vmul.f32 %v1092, %v1204
      %v1221 = vlaneseq
      %v1222 = vshrl.u32 %v1221, 7
      %v1223 = vsub.s32 0, %v1222
      %v1224 = vrot.slane %v327, %v1223
      %v1225 = vmul.f32 %v1205, %v1224
      %v1226 = vmul.f32 %v1206, %v1224
      %v1227 = vmul.f32 %v1207, %v1224
      %v1228 = vmul.f32 %v1208, %v1224
      %v1229 = vmul.f32 %v1209, %v1224
      %v1230 = vmul.f32 %v1210, %v1224
      %v1231 = vmul.f32 %v1211, %v1224
      %v1232 = vmul.f32 %v1212, %v1224
      %v1233 = vmul.f32 %v1213, %v1224
      %v1234 = vmul.f32 %v1214, %v1224
      %v1235 = vmul.f32 %v1215, %v1224
      %v1236 = vmul.f32 %v1216, %v1224
      %v1237 = vmul.f32 %v1217, %v1224
      %v1238 = vmul.f32 %v1218, %v1224
      %v1239 = vmul.f32 %v1219, %v1224
      %v1240 = vmul.f32 %v1220, %v1224
      %v1241 = vlaneseq
      %v1242 = vshrl.u32 %v1241, 7
      %v1243 = vsub.s32 0, %v1242
      %v1244 = vrot.slane %v328, %v1243
      %v1245 = vadd.f32 %v1225, %v1244
      %v1246 = vadd.f32 %v1226, %v1244
      %v1247 = vadd.f32 %v1227, %v1244
      %v1248 = vadd.f32 %v1228, %v1244
      %v1249 = vadd.f32 %v1229, %v1244
      %v1250 = vadd.f32 %v1230, %v1244
      %v1251 = vadd.f32 %v1231, %v1244
      %v1252 = vadd.f32 %v1232, %v1244
      %v1253 = vadd.f32 %v1233, %v1244
      %v1254 = vadd.f32 %v1234, %v1244
      %v1255 = vadd.f32 %v1235, %v1244
      %v1256 = vadd.f32 %v1236, %v1244
      %v1257 = vadd.f32 %v1237, %v1244
      %v1258 = vadd.f32 %v1238, %v1244
      %v1259 = vadd.f32 %v1239, %v1244
      %v1260 = vadd.f32 %v1240, %v1244
      %v1261 = vmax.f32 %v1245, 0.0
      %v1262 = vmax.f32 %v1246, 0.0
      %v1263 = vmax.f32 %v1247, 0.0
      %v1264 = vmax.f32 %v1248, 0.0
      %v1265 = vmax.f32 %v1249, 0.0
      %v1266 = vmax.f32 %v1250, 0.0
      %v1267 = vmax.f32 %v1251, 0.0
      %v1268 = vmax.f32 %v1252, 0.0
      %v1269 = vmax.f32 %v1253, 0.0
      %v1270 = vmax.f32 %v1254, 0.0
      %v1271 = vmax.f32 %v1255, 0.0
      %v1272 = vmax.f32 %v1256, 0.0
      %v1273 = vmax.f32 %v1257, 0.0
      %v1274 = vmax.f32 %v1258, 0.0
      %v1275 = vmax.f32 %v1259, 0.0
      %v1276 = vmax.f32 %v1260, 0.0
      %v1277 = vld [vmem:[%s3] sm:$0xff]
      %v1278 = vld [vmem:[%s3 + $0x8] sm:$0xff]
      %v1279 = vld [vmem:[%s3 + $0x10] sm:$0xff]
      %v1280 = vld [vmem:[%s3 + $0x18] sm:$0xff]
      %v1281 = vlaneseq
      %v1282 = vshrl.u32 %v1281, 7
      %v1283 = vsub.s32 0, %v1282
      %v1284 = vrot.slane %v329, %v1283
      %v1286 = vsel %vm546, %v1261, 0
      %v1289 = vsel %vm546, %v1262, 0
      %v1292 = vsel %vm546, %v1263, 0
      %v1295 = vsel %vm546, %v1264, 0
      %v1298 = vsel %vm546, %v1265, 0
      %v1301 = vsel %vm546, %v1266, 0
      %v1304 = vsel %vm546, %v1267, 0
      %v1307 = vsel %vm546, %v1268, 0
      %v1310 = vsel %vm546, %v1269, 0
      %v1313 = vsel %vm546, %v1270, 0
      %v1316 = vsel %vm546, %v1271, 0
      %v1319 = vsel %vm546, %v1272, 0
      %v1322 = vsel %vm546, %v1273, 0
      %v1325 = vsel %vm546, %v1274, 0
      %v1328 = vsel %vm546, %v1275, 0
      %v1331 = vsel %vm546, %v1276, 0
      %1333 = vmatprep.subr.mxu0 0.0
      %1334 = vmatpush1.msra.mxu0 %v1277
      %1335 = vmatprep.subr.mxu0 0.0
      %1336 = vmatpush1.msra.mxu0 %v1278
      %1337 = vmatprep.subr.mxu0 0.0
      %1338 = vmatpush1.msra.mxu0 %v1279
      %1339 = vmatprep.subr.mxu0 0.0
      %1340 = vmatpush1.msra.mxu0 %v1280
      %1341 = vmatprep.subr.mxu0 0.0
      %1342 = vmatpush1.msra.mxu0 0.0
      %1343 = vmatprep.subr.mxu0 0.0
      %1344 = vmatpush1.msra.mxu0 0.0
      %1345 = vmatprep.subr.mxu0 0.0
      %1346 = vmatpush1.msra.mxu0 0.0
      %1347 = vmatprep.subr.mxu0 0.0
      %1348 = vmatpush1.msra.mxu0 0.0
      %1349 = vmatprep.subr.mxu0 0.0
      %1350 = vmatpush1.msra.mxu0 0.0
      %1351 = vmatprep.subr.mxu0 0.0
      %1352 = vmatpush1.msra.mxu0 0.0
      %1353 = vmatprep.subr.mxu0 0.0
      %1354 = vmatpush1.msra.mxu0 0.0
      %1355 = vmatprep.subr.mxu0 0.0
      %1356 = vmatpush1.msra.mxu0 0.0
      %1357 = vmatprep.subr.mxu0 0.0
      %1358 = vmatpush1.msra.mxu0 0.0
      %1359 = vmatprep.subr.mxu0 0.0
      %1360 = vmatpush1.msra.mxu0 0.0
      %1361 = vmatprep.subr.mxu0 0.0
      %1362 = vmatpush1.msra.mxu0 0.0
      %1363 = vmatprep.subr.mxu0 0.0
      %1364 = vmatpush1.msra.mxu0 0.0
      %1365 = vmatprep.subr.mxu0 0.0
      %1366 = vmatpush1.msra.mxu0 0.0
      %1367 = vmatprep.subr.mxu0 0.0
      %1368 = vmatpush1.msra.mxu0 0.0
      %1369 = vmatprep.subr.mxu0 0.0
      %1370 = vmatpush1.msra.mxu0 0.0
      %1371 = vmatprep.subr.mxu0 0.0
      %1372 = vmatpush1.msra.mxu0 0.0
      %1373 = vmatprep.subr.mxu0 0.0
      %1374 = vmatpush1.msra.mxu0 0.0
      %1375 = vmatprep.subr.mxu0 0.0
      %1376 = vmatpush1.msra.mxu0 0.0
      %1377 = vmatprep.subr.mxu0 0.0
      %1378 = vmatpush1.msra.mxu0 0.0
      %1379 = vmatprep.subr.mxu0 0.0
      %1380 = vmatpush1.msra.mxu0 0.0
      %1381 = vmatprep.subr.mxu0 0.0
      %1382 = vmatpush1.msra.mxu0 0.0
      %1383 = vmatprep.subr.mxu0 0.0
      %1384 = vmatpush1.msra.mxu0 0.0
      %1385 = vmatprep.subr.mxu0 0.0
      %1386 = vmatpush1.msra.mxu0 0.0
      %1387 = vmatprep.subr.mxu0 0.0
      %1388 = vmatpush1.msra.mxu0 0.0
      %1389 = vmatprep.subr.mxu0 0.0
      %1390 = vmatpush1.msra.mxu0 0.0
      %1391 = vmatprep.subr.mxu0 0.0
      %1392 = vmatpush1.msra.mxu0 0.0
      %1393 = vmatprep.subr.mxu0 0.0
      %1394 = vmatpush1.msra.mxu0 0.0
      %1395 = vmatprep.subr.mxu0 0.0
      %1396 = vmatpush1.msra.mxu0 0.0
      %1397 = vmatprep.mubr.f32.mxu0 0.0
      %1398 = vmatmul.mubr.f32.gmra.mrb[0].mxu0 %v1286
      %v1399 = vpop.f32.mrb[0].mxu0
      %v1400 = vadd.f32 %v1284, %v1399
      %v1401 = vpop.f32.mrb[0].mxu0
      %1402 = vmatprep.mubr.f32.mxu0 0.0
      %1403 = vmatmul.mubr.f32.gmra.mrb[0].mxu0 %v1289
      %v1404 = vpop.f32.mrb[0].mxu0
      %v1405 = vadd.f32 %v1284, %v1404
      %v1406 = vpop.f32.mrb[0].mxu0
      %1407 = vmatprep.mubr.f32.mxu0 0.0
      %1408 = vmatmul.mubr.f32.gmra.mrb[0].mxu0 %v1292
      %v1409 = vpop.f32.mrb[0].mxu0
      %v1410 = vadd.f32 %v1284, %v1409
      %v1411 = vpop.f32.mrb[0].mxu0
      %1412 = vmatprep.mubr.f32.mxu0 0.0
      %1413 = vmatmul.mubr.f32.gmra.mrb[0].mxu0 %v1295
      %v1414 = vpop.f32.mrb[0].mxu0
      %v1415 = vadd.f32 %v1284, %v1414
      %v1416 = vpop.f32.mrb[0].mxu0
      %1417 = vmatprep.mubr.f32.mxu0 0.0
      %1418 = vmatmul.mubr.f32.gmra.mrb[0].mxu0 %v1298
      %v1419 = vpop.f32.mrb[0].mxu0
      %v1420 = vadd.f32 %v1284, %v1419
      %v1421 = vpop.f32.mrb[0].mxu0
      %1422 = vmatprep.mubr.f32.mxu0 0.0
      %1423 = vmatmul.mubr.f32.gmra.mrb[0].mxu0 %v1301
      %v1424 = vpop.f32.mrb[0].mxu0
      %v1425 = vadd.f32 %v1284, %v1424
      %v1426 = vpop.f32.mrb[0].mxu0
      %1427 = vmatprep.mubr.f32.mxu0 0.0
      %1428 = vmatmul.mubr.f32.gmra.mrb[0].mxu0 %v1304
      %v1429 = vpop.f32.mrb[0].mxu0
      %v1430 = vadd.f32 %v1284, %v1429
      %v1431 = vpop.f32.mrb[0].mxu0
      %1432 = vmatprep.mubr.f32.mxu0 0.0
      %1433 = vmatmul.mubr.f32.gmra.mrb[0].mxu0 %v1307
      %v1434 = vpop.f32.mrb[0].mxu0
      %v1435 = vadd.f32 %v1284, %v1434
      %v1436 = vpop.f32.mrb[0].mxu0
      %1437 = vmatprep.mubr.f32.mxu0 0.0
      %1438 = vmatmul.mubr.f32.gmra.mrb[0].mxu0 %v1310
      %v1439 = vpop.f32.mrb[0].mxu0
      %v1440 = vadd.f32 %v1284, %v1439
      %v1441 = vpop.f32.mrb[0].mxu0
      %1442 = vmatprep.mubr.f32.mxu0 0.0
      %1443 = vmatmul.mubr.f32.gmra.mrb[0].mxu0 %v1313
      %v1444 = vpop.f32.mrb[0].mxu0
      %v1445 = vadd.f32 %v1284, %v1444
      %v1446 = vpop.f32.mrb[0].mxu0
      %1447 = vmatprep.mubr.f32.mxu0 0.0
      %1448 = vmatmul.mubr.f32.gmra.mrb[0].mxu0 %v1316
      %v1449 = vpop.f32.mrb[0].mxu0
      %v1450 = vadd.f32 %v1284, %v1449
      %v1451 = vpop.f32.mrb[0].mxu0
      %1452 = vmatprep.mubr.f32.mxu0 0.0
      %1453 = vmatmul.mubr.f32.gmra.mrb[0].mxu0 %v1319
      %v1454 = vpop.f32.mrb[0].mxu0
      %v1455 = vadd.f32 %v1284, %v1454
      %v1456 = vpop.f32.mrb[0].mxu0
      %1457 = vmatprep.mubr.f32.mxu0 0.0
      %1458 = vmatmul.mubr.f32.gmra.mrb[0].mxu0 %v1322
      %v1459 = vpop.f32.mrb[0].mxu0
      %v1460 = vadd.f32 %v1284, %v1459
      %v1461 = vpop.f32.mrb[0].mxu0
      %1462 = vmatprep.mubr.f32.mxu0 0.0
      %1463 = vmatmul.mubr.f32.gmra.mrb[0].mxu0 %v1325
      %v1464 = vpop.f32.mrb[0].mxu0
      %v1465 = vadd.f32 %v1284, %v1464
      %v1466 = vpop.f32.mrb[0].mxu0
      %1467 = vmatprep.mubr.f32.mxu0 0.0
      %1468 = vmatmul.mubr.f32.gmra.mrb[0].mxu0 %v1328
      %v1469 = vpop.f32.mrb[0].mxu0
      %v1470 = vadd.f32 %v1284, %v1469
      %v1471 = vpop.f32.mrb[0].mxu0
      %1472 = vmatprep.mubr.f32.mxu0 0.0
      %1473 = vmatmul.mubr.f32.gmra.mrb[0].mxu0 %v1331
      %v1474 = vpop.f32.mrb[0].mxu0
      %v1475 = vadd.f32 %v1284, %v1474
      %v1476 = vpop.f32.mrb[0].mxu0
      %1477 = vdwg.mxu0
      %v1478 = vmax.f32 %v1400, 0.0
      %v1479 = vmax.f32 %v1405, 0.0
      %v1480 = vmax.f32 %v1410, 0.0
      %v1481 = vmax.f32 %v1415, 0.0
      %v1482 = vmax.f32 %v1420, 0.0
      %v1483 = vmax.f32 %v1425, 0.0
      %v1484 = vmax.f32 %v1430, 0.0
      %v1485 = vmax.f32 %v1435, 0.0
      %v1486 = vmax.f32 %v1440, 0.0
      %v1487 = vmax.f32 %v1445, 0.0
      %v1488 = vmax.f32 %v1450, 0.0
      %v1489 = vmax.f32 %v1455, 0.0
      %v1490 = vmax.f32 %v1460, 0.0
      %v1491 = vmax.f32 %v1465, 0.0
      %v1492 = vmax.f32 %v1470, 0.0
      %v1493 = vmax.f32 %v1475, 0.0
      %v1494 = vld [vmem:[%s4] sm:$0xff]
      %v1495 = vld [vmem:[%s4 + $0x8] sm:$0xff]
      %v1496 = vld [vmem:[%s4 + $0x10] sm:$0xff]
      %v1497 = vld [vmem:[%s4 + $0x18] sm:$0xff]
      %v1498 = vld [vmem:[%s6] sm:$0x1]
      %v1500 = vlaneseq
      %v1501 = vshrl.u32 %v1500, 7
      %v1502 = vsub.s32 0, %v1501
      %v1503 = vrot.slane %v1498, %v1502
      %v1506 = vsel %vm546, %v1478, 0
      %v1509 = vsel %vm546, %v1479, 0
      %v1512 = vsel %vm546, %v1480, 0
      %v1515 = vsel %vm546, %v1481, 0
      %v1518 = vsel %vm546, %v1482, 0
      %v1521 = vsel %vm546, %v1483, 0
      %v1524 = vsel %vm546, %v1484, 0
      %v1527 = vsel %vm546, %v1485, 0
      %v1530 = vsel %vm546, %v1486, 0
      %v1533 = vsel %vm546, %v1487, 0
      %v1536 = vsel %vm546, %v1488, 0
      %v1539 = vsel %vm546, %v1489, 0
      %v1542 = vsel %vm546, %v1490, 0
      %v1545 = vsel %vm546, %v1491, 0
      %v1548 = vsel %vm546, %v1492, 0
      %v1551 = vsel %vm546, %v1493, 0
      %1553 = vmatprep.subr.mxu0 0.0
      %1554 = vmatpush1.msra.mxu0 %v1494
      %1555 = vmatprep.subr.mxu0 0.0
      %1556 = vmatpush1.msra.mxu0 %v1495
      %1557 = vmatprep.subr.mxu0 0.0
      %1558 = vmatpush1.msra.mxu0 %v1496
      %1559 = vmatprep.subr.mxu0 0.0
      %1560 = vmatpush1.msra.mxu0 %v1497
      %1561 = vmatprep.subr.mxu0 0.0
      %1562 = vmatpush1.msra.mxu0 0.0
      %1563 = vmatprep.subr.mxu0 0.0
      %1564 = vmatpush1.msra.mxu0 0.0
      %1565 = vmatprep.subr.mxu0 0.0
      %1566 = vmatpush1.msra.mxu0 0.0
      %1567 = vmatprep.subr.mxu0 0.0
      %1568 = vmatpush1.msra.mxu0 0.0
      %1569 = vmatprep.subr.mxu0 0.0
      %1570 = vmatpush1.msra.mxu0 0.0
      %1571 = vmatprep.subr.mxu0 0.0
      %1572 = vmatpush1.msra.mxu0 0.0
      %1573 = vmatprep.subr.mxu0 0.0
      %1574 = vmatpush1.msra.mxu0 0.0
      %1575 = vmatprep.subr.mxu0 0.0
      %1576 = vmatpush1.msra.mxu0 0.0
      %1577 = vmatprep.subr.mxu0 0.0
      %1578 = vmatpush1.msra.mxu0 0.0
      %1579 = vmatprep.subr.mxu0 0.0
      %1580 = vmatpush1.msra.mxu0 0.0
      %1581 = vmatprep.subr.mxu0 0.0
      %1582 = vmatpush1.msra.mxu0 0.0
      %1583 = vmatprep.subr.mxu0 0.0
      %1584 = vmatpush1.msra.mxu0 0.0
      %1585 = vmatprep.subr.mxu0 0.0
      %1586 = vmatpush1.msra.mxu0 0.0
      %1587 = vmatprep.subr.mxu0 0.0
      %1588 = vmatpush1.msra.mxu0 0.0
      %1589 = vmatprep.subr.mxu0 0.0
      %1590 = vmatpush1.msra.mxu0 0.0
      %1591 = vmatprep.subr.mxu0 0.0
      %1592 = vmatpush1.msra.mxu0 0.0
      %1593 = vmatprep.subr.mxu0 0.0
      %1594 = vmatpush1.msra.mxu0 0.0
      %1595 = vmatprep.subr.mxu0 0.0
      %1596 = vmatpush1.msra.mxu0 0.0
      %1597 = vmatprep.subr.mxu0 0.0
      %1598 = vmatpush1.msra.mxu0 0.0
      %1599 = vmatprep.subr.mxu0 0.0
      %1600 = vmatpush1.msra.mxu0 0.0
      %1601 = vmatprep.subr.mxu0 0.0
      %1602 = vmatpush1.msra.mxu0 0.0
      %1603 = vmatprep.subr.mxu0 0.0
      %1604 = vmatpush1.msra.mxu0 0.0
      %1605 = vmatprep.subr.mxu0 0.0
      %1606 = vmatpush1.msra.mxu0 0.0
      %1607 = vmatprep.subr.mxu0 0.0
      %1608 = vmatpush1.msra.mxu0 0.0
      %1609 = vmatprep.subr.mxu0 0.0
      %1610 = vmatpush1.msra.mxu0 0.0
      %1611 = vmatprep.subr.mxu0 0.0
      %1612 = vmatpush1.msra.mxu0 0.0
      %1613 = vmatprep.subr.mxu0 0.0
      %1614 = vmatpush1.msra.mxu0 0.0
      %1615 = vmatprep.subr.mxu0 0.0
      %1616 = vmatpush1.msra.mxu0 0.0
      %1617 = vmatprep.mubr.f32.mxu0 0.0
      %1618 = vmatmul.mubr.f32.gmra.mrb[0].mxu0 %v1506
      %v1619 = vpop.f32.mrb[0].mxu0
      %v1620 = vadd.f32 %v1503, %v1619
      %v1621 = vpop.f32.mrb[0].mxu0
      %1622 = vmatprep.mubr.f32.mxu0 0.0
      %1623 = vmatmul.mubr.f32.gmra.mrb[0].mxu0 %v1509
      %v1624 = vpop.f32.mrb[0].mxu0
      %v1625 = vadd.f32 %v1503, %v1624
      %v1626 = vpop.f32.mrb[0].mxu0
      %1627 = vmatprep.mubr.f32.mxu0 0.0
      %1628 = vmatmul.mubr.f32.gmra.mrb[0].mxu0 %v1512
      %v1629 = vpop.f32.mrb[0].mxu0
      %v1630 = vadd.f32 %v1503, %v1629
      %v1631 = vpop.f32.mrb[0].mxu0
      %1632 = vmatprep.mubr.f32.mxu0 0.0
      %1633 = vmatmul.mubr.f32.gmra.mrb[0].mxu0 %v1515
      %v1634 = vpop.f32.mrb[0].mxu0
      %v1635 = vadd.f32 %v1503, %v1634
      %v1636 = vpop.f32.mrb[0].mxu0
      %1637 = vmatprep.mubr.f32.mxu0 0.0
      %1638 = vmatmul.mubr.f32.gmra.mrb[0].mxu0 %v1518
      %v1639 = vpop.f32.mrb[0].mxu0
      %v1640 = vadd.f32 %v1503, %v1639
      %v1641 = vpop.f32.mrb[0].mxu0
      %1642 = vmatprep.mubr.f32.mxu0 0.0
      %1643 = vmatmul.mubr.f32.gmra.mrb[0].mxu0 %v1521
      %v1644 = vpop.f32.mrb[0].mxu0
      %v1645 = vadd.f32 %v1503, %v1644
      %v1646 = vpop.f32.mrb[0].mxu0
      %1647 = vmatprep.mubr.f32.mxu0 0.0
      %1648 = vmatmul.mubr.f32.gmra.mrb[0].mxu0 %v1524
      %v1649 = vpop.f32.mrb[0].mxu0
      %v1650 = vadd.f32 %v1503, %v1649
      %v1651 = vpop.f32.mrb[0].mxu0
      %1652 = vmatprep.mubr.f32.mxu0 0.0
      %1653 = vmatmul.mubr.f32.gmra.mrb[0].mxu0 %v1527
      %v1654 = vpop.f32.mrb[0].mxu0
      %v1655 = vadd.f32 %v1503, %v1654
      %v1656 = vpop.f32.mrb[0].mxu0
      %1657 = vmatprep.mubr.f32.mxu0 0.0
      %1658 = vmatmul.mubr.f32.gmra.mrb[0].mxu0 %v1530
      %v1659 = vpop.f32.mrb[0].mxu0
      %v1660 = vadd.f32 %v1503, %v1659
      %v1661 = vpop.f32.mrb[0].mxu0
      %1662 = vmatprep.mubr.f32.mxu0 0.0
      %1663 = vmatmul.mubr.f32.gmra.mrb[0].mxu0 %v1533
      %v1664 = vpop.f32.mrb[0].mxu0
      %v1665 = vadd.f32 %v1503, %v1664
      %v1666 = vpop.f32.mrb[0].mxu0
      %1667 = vmatprep.mubr.f32.mxu0 0.0
      %1668 = vmatmul.mubr.f32.gmra.mrb[0].mxu0 %v1536
      %v1669 = vpop.f32.mrb[0].mxu0
      %v1670 = vadd.f32 %v1503, %v1669
      %v1671 = vpop.f32.mrb[0].mxu0
      %1672 = vmatprep.mubr.f32.mxu0 0.0
      %1673 = vmatmul.mubr.f32.gmra.mrb[0].mxu0 %v1539
      %v1674 = vpop.f32.mrb[0].mxu0
      %v1675 = vadd.f32 %v1503, %v1674
      %v1676 = vpop.f32.mrb[0].mxu0
      %1677 = vmatprep.mubr.f32.mxu0 0.0
      %1678 = vmatmul.mubr.f32.gmra.mrb[0].mxu0 %v1542
      %v1679 = vpop.f32.mrb[0].mxu0
      %v1680 = vadd.f32 %v1503, %v1679
      %v1681 = vpop.f32.mrb[0].mxu0
      %1682 = vmatprep.mubr.f32.mxu0 0.0
      %1683 = vmatmul.mubr.f32.gmra.mrb[0].mxu0 %v1545
      %v1684 = vpop.f32.mrb[0].mxu0
      %v1685 = vadd.f32 %v1503, %v1684
      %v1686 = vpop.f32.mrb[0].mxu0
      %1687 = vmatprep.mubr.f32.mxu0 0.0
      %1688 = vmatmul.mubr.f32.gmra.mrb[0].mxu0 %v1548
      %v1689 = vpop.f32.mrb[0].mxu0
      %v1690 = vadd.f32 %v1503, %v1689
      %v1691 = vpop.f32.mrb[0].mxu0
      %1692 = vmatprep.mubr.f32.mxu0 0.0
      %1693 = vmatmul.mubr.f32.gmra.mrb[0].mxu0 %v1551
      %v1694 = vpop.f32.mrb[0].mxu0
      %v1695 = vadd.f32 %v1503, %v1694
      %v1696 = vpop.f32.mrb[0].mxu0
      %1697 = vdwg.mxu0
      %v1698 = vtanh.pop %v1620
      %v1699 = vtanh.pop %v1625
      %v1700 = vtanh.pop %v1630
      %v1701 = vtanh.pop %v1635
      %v1702 = vtanh.pop %v1640
      %v1703 = vtanh.pop %v1645
      %v1704 = vtanh.pop %v1650
      %v1705 = vtanh.pop %v1655
      %v1706 = vtanh.pop %v1660
      %v1707 = vtanh.pop %v1665
      %v1708 = vtanh.pop %v1670
      %v1709 = vtanh.pop %v1675
      %v1710 = vtanh.pop %v1680
      %v1711 = vtanh.pop %v1685
      %v1712 = vtanh.pop %v1690
      %v1713 = vtanh.pop %v1695
      %vm1714 = vcmask 7168
      %1715 = vst.msk [vmem:[%s315] sm:$0xff] %vm1714, %v1698
      %1716 = vst.msk [vmem:[%s315 + $0x8] sm:$0xff] %vm1714, %v1699
      %1717 = vst.msk [vmem:[%s315 + $0x10] sm:$0xff] %vm1714, %v1700
      %1718 = vst.msk [vmem:[%s315 + $0x18] sm:$0xff] %vm1714, %v1701
      %1719 = vst.msk [vmem:[%s315 + $0x20] sm:$0xff] %vm1714, %v1702
      %1720 = vst.msk [vmem:[%s315 + $0x28] sm:$0xff] %vm1714, %v1703
      %1721 = vst.msk [vmem:[%s315 + $0x30] sm:$0xff] %vm1714, %v1704
      %1722 = vst.msk [vmem:[%s315 + $0x38] sm:$0xff] %vm1714, %v1705
      %1723 = vst.msk [vmem:[%s315 + $0x40] sm:$0xff] %vm1714, %v1706
      %1724 = vst.msk [vmem:[%s315 + $0x48] sm:$0xff] %vm1714, %v1707
      %1725 = vst.msk [vmem:[%s315 + $0x50] sm:$0xff] %vm1714, %v1708
      %1726 = vst.msk [vmem:[%s315 + $0x58] sm:$0xff] %vm1714, %v1709
      %1727 = vst.msk [vmem:[%s315 + $0x60] sm:$0xff] %vm1714, %v1710
      %1728 = vst.msk [vmem:[%s315 + $0x68] sm:$0xff] %vm1714, %v1711
      %1729 = vst.msk [vmem:[%s315 + $0x70] sm:$0xff] %vm1714, %v1712
      %1730 = vst.msk [vmem:[%s315 + $0x78] sm:$0xff] %vm1714, %v1713
      %1747 = vrot.lane.b32.xlu0 %v1620, 127
      %v1748 = vpop.permute.xlu0 %1747
      %1749 = vrot.lane.b32.xlu0 %v1625, 127
      %v1750 = vpop.permute.xlu0 %1749
      %1751 = vrot.lane.b32.xlu0 %v1630, 127
      %v1752 = vpop.permute.xlu0 %1751
      %1753 = vrot.lane.b32.xlu0 %v1635, 127
      %v1754 = vpop.permute.xlu0 %1753
      %1755 = vrot.lane.b32.xlu0 %v1640, 127
      %v1756 = vpop.permute.xlu0 %1755
      %1757 = vrot.lane.b32.xlu0 %v1645, 127
      %v1758 = vpop.permute.xlu0 %1757
      %1759 = vrot.lane.b32.xlu0 %v1650, 127
      %v1760 = vpop.permute.xlu0 %1759
      %1761 = vrot.lane.b32.xlu0 %v1655, 127
      %v1762 = vpop.permute.xlu0 %1761
      %1763 = vrot.lane.b32.xlu0 %v1660, 127
      %v1764 = vpop.permute.xlu0 %1763
      %1765 = vrot.lane.b32.xlu0 %v1665, 127
      %v1766 = vpop.permute.xlu0 %1765
      %1767 = vrot.lane.b32.xlu0 %v1670, 127
      %v1768 = vpop.permute.xlu0 %1767
      %1769 = vrot.lane.b32.xlu0 %v1675, 127
      %v1770 = vpop.permute.xlu0 %1769
      %1771 = vrot.lane.b32.xlu0 %v1680, 127
      %v1772 = vpop.permute.xlu0 %1771
      %1773 = vrot.lane.b32.xlu0 %v1685, 127
      %v1774 = vpop.permute.xlu0 %1773
      %1775 = vrot.lane.b32.xlu0 %v1690, 127
      %v1776 = vpop.permute.xlu0 %1775
      %1777 = vrot.lane.b32.xlu0 %v1695, 127
      %v1778 = vpop.permute.xlu0 %1777
      %1795 = vst.msk [vmem:[%s321] sm:$0xff] %vm1714, %v1748
      %1796 = vst.msk [vmem:[%s321 + $0x8] sm:$0xff] %vm1714, %v1750
      %1797 = vst.msk [vmem:[%s321 + $0x10] sm:$0xff] %vm1714, %v1752
      %1798 = vst.msk [vmem:[%s321 + $0x18] sm:$0xff] %vm1714, %v1754
      %1799 = vst.msk [vmem:[%s321 + $0x20] sm:$0xff] %vm1714, %v1756
      %1800 = vst.msk [vmem:[%s321 + $0x28] sm:$0xff] %vm1714, %v1758
      %1801 = vst.msk [vmem:[%s321 + $0x30] sm:$0xff] %vm1714, %v1760
      %1802 = vst.msk [vmem:[%s321 + $0x38] sm:$0xff] %vm1714, %v1762
      %1803 = vst.msk [vmem:[%s321 + $0x40] sm:$0xff] %vm1714, %v1764
      %1804 = vst.msk [vmem:[%s321 + $0x48] sm:$0xff] %vm1714, %v1766
      %1805 = vst.msk [vmem:[%s321 + $0x50] sm:$0xff] %vm1714, %v1768
      %1806 = vst.msk [vmem:[%s321 + $0x58] sm:$0xff] %vm1714, %v1770
      %1807 = vst.msk [vmem:[%s321 + $0x60] sm:$0xff] %vm1714, %v1772
      %1808 = vst.msk [vmem:[%s321 + $0x68] sm:$0xff] %vm1714, %v1774
      %1809 = vst.msk [vmem:[%s321 + $0x70] sm:$0xff] %vm1714, %v1776
      %1810 = vst.msk [vmem:[%s321 + $0x78] sm:$0xff] %vm1714, %v1778
      %s1811 = smul.u32 16, %s20
      %p1812 = scmp.lt.s32.totalorder %s1811, 31
      %s1813 = scalar_select %p1812, %s1811, 31
      %s1814 = smul.addr %s1813, 8
      %s1815 = scalar_lea.vmem %s7, %s1814
      %s1816 = smul.u32 16, %s20
      %p1817 = scmp.lt.s32.totalorder %s1816, 31
      %s1818 = scalar_select %p1817, %s1816, 31
      %s1819 = smul.addr %s1818, 8
      %s1820 = scalar_lea.vmem %s8, %s1819
      // Predicated region
      $region49: #{tpu_custom_call.1} parent=47 // pred_check
        %p1821 = pneg %p190
      $region50: #{tpu_custom_call.1} parent=47 // pred_check_branch
        %1823 = sbr.rel (%p1821) target = $region52
      $region51: #{tpu_custom_call.1} parent=47 // pred_region
        %s1824 = smul.u32 16, %s20
      $region52: #{tpu_custom_call.1} parent=47 // pred_fallthru
        _
      // Predicated region
      $region53: #{tpu_custom_call.1} parent=47 // pred_check
        %p1825 = pneg %p216
      $region54: #{tpu_custom_call.1} parent=47 // pred_check_branch
        %1827 = sbr.rel (%p1825) target = $region56
      $region55: #{tpu_custom_call.1} parent=47 // pred_region
        %s1828 = smul.u32 16, %s20
      $region56: #{tpu_custom_call.1} parent=47 // pred_fallthru
        _
    $region48: #{tpu_custom_call.1} parent=5 // pred_fallthru
      _
    %p1829 = scmp.le.s32.totalorder 2, %s15
    // Predicated region
    $region57: #{tpu_custom_call.1} parent=5 // pred_check
      %p1830 = pneg %p1829
    $region58: #{tpu_custom_call.1} parent=5 // pred_check_branch
      %1832 = sbr.rel (%p1830) target = $region60
    $region59: #{tpu_custom_call.1} parent=5 // pred_region
      %s1833 = ssub.s32 %s15, 2
      // Predicated region
      $region61: #{tpu_custom_call.1} parent=59 // pred_check
        %p1834 = pneg %p196
      $region62: #{tpu_custom_call.1} parent=59 // pred_check_branch
        %1836 = sbr.rel (%p1834) target = $region64
      $region63: #{tpu_custom_call.1} parent=59 // pred_region
        %s1837 = smul.u32 16, %s21
        %p1838 = scmp.lt.s32.totalorder %s1837, 31
        %s1839 = scalar_select %p1838, %s1837, 31
        %s1840 = smul.addr %s1839, 8
        %s1841 = scalar_lea.vmem %s7, %s1840
      $region64: #{tpu_custom_call.1} parent=59 // pred_fallthru
        _
      // Predicated region
      $region65: #{tpu_custom_call.1} parent=59 // pred_check
        %p1842 = pneg %p222
      $region66: #{tpu_custom_call.1} parent=59 // pred_check_branch
        %1844 = sbr.rel (%p1842) target = $region68
      $region67: #{tpu_custom_call.1} parent=59 // pred_region
        %s1845 = smul.u32 16, %s21
        %p1846 = scmp.lt.s32.totalorder %s1845, 31
        %s1847 = scalar_select %p1846, %s1845, 31
        %s1848 = smul.addr %s1847, 8
        %s1849 = scalar_lea.vmem %s8, %s1848
      $region68: #{tpu_custom_call.1} parent=59 // pred_fallthru
        _
    $region60: #{tpu_custom_call.1} parent=5 // pred_fallthru
      _
  $region6: #{tpu_custom_call.1} parent=0 // loop_footer
    %s19 = sadd.s32 1, %s15
  $region7: #{tpu_custom_call.1} parent=0 // loop_footer_branch
    %14 = sbr.rel target = $region3
  $region8: #{tpu_custom_call.1} parent=0 // loop_exit
    _

</llo_original>
